<compile_context>
chip_gen: v7x
topology: tpu7x:2x2x1
jax: 0.10.0
libtpu: 0.0.40
codegen_flags: <defaults>
</compile_context>

<pallas_src>
import functools

import jax
import jax.numpy as jnp
from jax import lax
from jax.experimental import pallas as pl
from jax.experimental.pallas import tpu as pltpu


def _round_up(x, m):
    return ((x + m - 1) // m) * m


def _vmem_capacity_bytes():
    try:
        return int(pltpu.get_tpu_info().vmem_capacity_bytes)
    except Exception:
        return 64 * 1024 * 1024          # conservative: v7x per-TC VMEM


def _make_moe_conv_kernel(ntaps, offsets, tq):
    """Build the kernel body; `offsets` are static per-tap flat shifts."""

    def kernel(x_hbm, w_ref, gate_ref, gbias_ref, out_ref, xbuf, sem):
        # x_hbm:     (N, C_r, L_in)        HBM-resident padded flat input
        # w_ref:     (ntaps, C_pad, C_r)   VMEM-resident weight (fetched once)
        # gate_ref:  (1, C_pad, 1)         per-(batch, out-channel) gate, f32
        # gbias_ref: (1, C_pad, 1)         gate * bias, f32
        # out_ref:   (1, C_pad, TQ)        lane-dense output tile
        # xbuf:      (C_r, TQ + halo)      VMEM scratch for the input halo tile
        # sem:       (1,)                  DMA semaphore
        n = pl.program_id(0)
        p = pl.program_id(1)
        q0 = pl.multiple_of(p * tq, 128)

        cp = pltpu.make_async_copy(
            x_hbm.at[n, :, pl.ds(q0, xbuf.shape[1])], xbuf, sem.at[0])
        cp.start()
        cp.wait()
        # TODO(synk): cross-step double-buffering of xbuf would also hide the
        # per-step DMA issue latency; kept synchronous for robustness.

        c_pad = w_ref.shape[1]
        acc = jnp.zeros((c_pad, tq), jnp.float32)
        for t in range(ntaps):            # static unroll over conv taps
            x_t = xbuf[:, pl.ds(offsets[t], tq)]
            acc = acc + jnp.dot(w_ref[t], x_t,
                                preferred_element_type=jnp.float32)

        # out = gate * conv + gate * bias   (f32 epilogue, broadcast over lanes)
        out_ref[0] = (acc * gate_ref[0] + gbias_ref[0]).astype(out_ref.dtype)

    return kernel


def _im2col_t(x, kernel_size, stride, padding, dilation):
    # Fallback (stride > 1): x (N, C_in, H, W) -> patches (N, K, P),
    # K ordered (C_in, KH, KW) to match a flattened OIHW weight.
    N, C_in, H, W = x.shape
    KH = KW = kernel_size
    H_out = (H + 2 * padding - dilation * (KH - 1) - 1) // stride + 1
    W_out = (W + 2 * padding - dilation * (KW - 1) - 1) // stride + 1
    x_pad = jnp.pad(x, ((0, 0), (0, 0), (padding, padding), (padding, padding)))
    slices = []
    for kh in range(KH):
        for kw in range(KW):
            h0 = kh * dilation
            w0 = kw * dilation
            sl = x_pad[:, :,
                       h0:h0 + (H_out - 1) * stride + 1:stride,
                       w0:w0 + (W_out - 1) * stride + 1:stride]
            slices.append(sl)                               # (N, C_in, Ho, Wo)
    patches = jnp.stack(slices, axis=2)                     # (N, C_in, KH*KW, Ho, Wo)
    patches = patches.reshape(N, C_in * KH * KW, H_out * W_out)
    return patches, H_out, W_out


def _pick_tile(l_out, c_r, c_pad, ntaps, max_off, in_item, out_item, n_batch):
    """Choose the lane tile TQ, halo and vmem limit from the VMEM capacity."""
    vmem_cap = _vmem_capacity_bytes()
    budget = min(int(0.45 * vmem_cap), 96 * 1024 * 1024)
    halo = _round_up(max_off, 128) if max_off > 0 else 0

    tq_cap = 4096
    if n_batch == 1 and l_out > 256:
        # Keep >= 2 parallel work units so the v7x megacore can use both TCs.
        tq_cap = min(tq_cap, max(128, _round_up(pl.cdiv(l_out, 2), 128)))
    tq = max(128, min(tq_cap, _round_up(l_out, 128)))

    def footprint(t):
        return (c_r * (t + halo) * in_item           # input halo tile
                + 2 * ntaps * c_pad * c_r * in_item  # resident weight
                + 2 * c_pad * t * out_item           # output (double-buffered)
                + 2 * c_pad * t * 4                  # f32 accumulator + epilogue
                + c_r * t * max(in_item, 4))         # per-tap operand slice

    while tq > 128 and footprint(tq) > budget:
        tq -= 128
    vmem_limit = int(min(max(footprint(tq) + (16 << 20), 32 << 20),
                         int(0.75 * vmem_cap)))
    return tq, halo, vmem_limit


@functools.partial(jax.jit,
                   static_argnames=("kernel_size", "stride", "padding",
                                    "dilation", "compute_dtype"))
def moe_layer_forward(x, gate_values, weight, bias, *, kernel_size, stride=1,
                      padding=0, dilation=1, compute_dtype=jnp.bfloat16):
    """Equivalent of MoELayer.forward: gate[n,co] * (conv2d(x)[n,co] + bias[co]).

    x:            (N, C_in, H, W)        NCHW (PyTorch layout)
    gate_values:  (N, C_out)
    weight:       (C_out, C_in, KH, KW)  OIHW
    bias:         (C_out,)
    compute_dtype: matmul operand dtype (default bf16); accumulation and the
                   gate/bias epilogue are always f32.
    """
    N, C_in, H, W = x.shape
    C_out = weight.shape[0]
    KH = KW = kernel_size
    out_dtype = x.dtype
    cdt = jnp.dtype(out_dtype if compute_dtype is None else compute_dtype)

    # Sub-32-bit outputs pack along sublanes -> round the channel dim further.
    c_sub = {4: 8, 2: 16, 1: 32}.get(jnp.dtype(out_dtype).itemsize, 8)
    C_pad = _round_up(C_out, c_sub)

    if stride == 1:
        # Fused im2col: flatten the zero-padded input; each conv tap is a
        # constant flat offset off = kh*dil*W_pad + kw*dil.  The output is
        # computed over a (H_out, W_pad) raster; the extra W_pad - W_out
        # columns per row are garbage and sliced off afterwards.
        H_pad, W_pad = H + 2 * padding, W + 2 * padding
        H_out = H_pad - dilation * (KH - 1)
        W_out = W_pad - dilation * (KW - 1)
        ntaps = KH * KW
        offsets = tuple(kh * dilation * W_pad + kw * dilation
                        for kh in range(KH) for kw in range(KW))
        C_r = _round_up(C_in, 8)
        L_out = H_out * W_pad
        row_w = W_pad
        x_k = jnp.pad(x, ((0, 0), (0, C_r - C_in),
                          (padding, padding), (padding, padding)))
        x_k = x_k.reshape(N, C_r, H_pad * W_pad)
        w_k = jnp.transpose(weight, (2, 3, 0, 1)).reshape(ntaps, C_out, C_in)
        w_k = jnp.pad(w_k, ((0, 0), (0, C_pad - C_out), (0, C_r - C_in)))
    else:
        # TODO(synk): fuse strided convs too (s*s downsampled input views);
        # for now fall back to wrapper-side im2col feeding the same kernel.
        x_k, H_out, W_out = _im2col_t(x, kernel_size, stride, padding, dilation)
        K = C_in * KH * KW
        ntaps = 1
        offsets = (0,)
        C_r = _round_up(K, 8)
        L_out = H_out * W_out
        row_w = W_out
        x_k = jnp.pad(x_k, ((0, 0), (0, C_r - K), (0, 0)))
        w_k = weight.reshape(1, C_out, K)
        w_k = jnp.pad(w_k, ((0, 0), (0, C_pad - C_out), (0, C_r - K)))

    x_k = x_k.astype(cdt)
    w_k = w_k.astype(cdt)

    in_item = cdt.itemsize
    out_item = jnp.dtype(out_dtype).itemsize
    TQ, halo, vmem_limit = _pick_tile(L_out, C_r, C_pad, ntaps, max(offsets),
                                      in_item, out_item, N)
    TQ_IN = TQ + halo
    L_out_pad = _round_up(L_out, TQ)
    Q_tiles = L_out_pad // TQ
    L_in = L_out_pad + halo                  # every halo DMA stays in bounds
    x_k = jnp.pad(x_k, ((0, 0), (0, 0), (0, L_in - x_k.shape[2])))

    gate = jnp.pad(gate_values.astype(jnp.float32),
                   ((0, 0), (0, C_pad - C_out)))
    bias_p = jnp.pad(bias.astype(jnp.float32), (0, C_pad - C_out))
    gbias = (gate * bias_p[None, :]).reshape(N, C_pad, 1)     # gate * bias
    gate = gate.reshape(N, C_pad, 1)

    flops = 2 * N * Q_tiles * ntaps * C_pad * C_r * TQ
    bytes_accessed = int(N * Q_tiles * C_r * TQ_IN * in_item
                         + ntaps * C_pad * C_r * in_item
                         + N * C_pad * L_out_pad * out_item
                         + 4 * N * C_pad * 4)

    out_t = pl.pallas_call(
        _make_moe_conv_kernel(ntaps, offsets, TQ),
        out_shape=jax.ShapeDtypeStruct((N, C_pad, L_out_pad), out_dtype),
        grid_spec=pltpu.PrefetchScalarGridSpec(
            num_scalar_prefetch=0,
            grid=(N, Q_tiles),
            in_specs=[
                pl.BlockSpec(memory_space=pl.ANY),                         # x (HBM)
                pl.BlockSpec((ntaps, C_pad, C_r), lambda n, p: (0, 0, 0)), # weight
                pl.BlockSpec((1, C_pad, 1), lambda n, p: (n, 0, 0)),       # gate
                pl.BlockSpec((1, C_pad, 1), lambda n, p: (n, 0, 0)),       # gate*bias
            ],
            out_specs=pl.BlockSpec((1, C_pad, TQ), lambda n, p: (n, 0, p)),
            scratch_shapes=[pltpu.VMEM((C_r, TQ_IN), cdt),
                            pltpu.SemaphoreType.DMA((1,))],
        ),
        compiler_params=pltpu.CompilerParams(
            dimension_semantics=("parallel", "parallel"),
            vmem_limit_bytes=vmem_limit),
        cost_estimate=pl.CostEstimate(
            flops=flops, transcendentals=0, bytes_accessed=bytes_accessed),
    )(x_k, w_k, gate, gbias)

    # (N, C_pad, L_out_pad) -> (N, C_out, H_out, row_w) -> drop garbage columns.
    out = out_t[:, :C_out, :H_out * row_w].reshape(N, C_out, H_out, row_w)
    return out[:, :, :, :W_out]


def _reference(x, gate_values, weight, bias, *, stride, padding, dilation):
    out = lax.conv_general_dilated(
        x, weight,
        window_strides=(stride, stride),
        padding=((padding, padding), (padding, padding)),
        rhs_dilation=(dilation, dilation),
        dimension_numbers=("NCHW", "OIHW", "NCHW"),
        precision=lax.Precision.HIGHEST)
    out = out + bias.reshape(1, -1, 1, 1)
    gate = gate_values.astype(x.dtype).reshape(x.shape[0], -1, 1, 1)
    return out * gate


if __name__ == "__main__":
    # batch=2, in_channels=4, out_channels=8, kernel=3, stride=1, padding=1, 16x16
    N, C_in, H, W = 2, 4, 16, 16
    C_out, ksize, stride, padding, dilation = 8, 3, 1, 1, 1

    key = jax.random.PRNGKey(0)
    kx, kg, kw, kb = jax.random.split(key, 4)
    x = jax.random.normal(kx, (N, C_in, H, W), dtype=jnp.float32)
    gate_values = jax.random.uniform(kg, (N, C_out), dtype=jnp.float32)
    # Deterministic Conv2d-style parameter init.
    fan_in = C_in * ksize * ksize
    bound = 1.0 / (fan_in ** 0.5)
    weight = jax.random.uniform(kw, (C_out, C_in, ksize, ksize),
                                minval=-bound, maxval=bound, dtype=jnp.float32)
    bias = jax.random.uniform(kb, (C_out,), minval=-bound, maxval=bound,
                              dtype=jnp.float32)

    ref = _reference(x, gate_values, weight, bias,
                     stride=stride, padding=padding, dilation=dilation)

    # f32-operand path: tight-ish tolerance.
    out_f32 = moe_layer_forward(x, gate_values, weight, bias,
                                kernel_size=ksize, stride=stride,
                                padding=padding, dilation=dilation,
                                compute_dtype=jnp.float32)
    out_f32 = jax.block_until_ready(out_f32)
    assert out_f32.shape == ref.shape, (out_f32.shape, ref.shape)
    assert jnp.allclose(out_f32, ref, atol=1e-2, rtol=1e-2), "f32 path mismatch"

    # Default path (bf16 operands, f32 accumulation): operand-cast tolerance.
    out_bf16 = moe_layer_forward(x, gate_values, weight, bias,
                                 kernel_size=ksize, stride=stride,
                                 padding=padding, dilation=dilation)
    out_bf16 = jax.block_until_ready(out_bf16)
    assert out_bf16.shape == ref.shape, (out_bf16.shape, ref.shape)
    assert jnp.allclose(out_bf16, ref, atol=6e-2, rtol=6e-2), "bf16 path mismatch"

    print("KERNEL_OK")
</pallas_src>

<mosaic_0001>
module attributes {stable_mosaic.version = 11 : i64} {
  func.func @kernel(%arg0: i32, %arg1: i32, %arg2: memref<2x8x512xf32, #tpu.memory_space<any>>, %arg3: memref<9x8x8xf32, #tpu.memory_space<vmem>>, %arg4: memref<1x8x1xf32, #tpu.memory_space<vmem>>, %arg5: memref<1x8x1xf32, #tpu.memory_space<vmem>>, %arg6: memref<1x8x384xf32, #tpu.memory_space<vmem>>, %arg7: memref<8x512xf32, #tpu.memory_space<vmem>>, %arg8: memref<1x!tpu.dma_semaphore, #tpu.memory_space<semaphore_mem>>) attributes {dimension_semantics = [#tpu.dimension_semantics<parallel>, #tpu.dimension_semantics<parallel>], iteration_bounds = array<i64: 2, 1>, scalar_prefetch = 0 : i64, scratch_operands = 2 : i64, tpu.core_type = #tpu.core_type<tc>, window_params = [{}, {pipeline_mode = #tpu.pipeline_mode<synchronous>, transform_indices = @transform_1, window_bounds = array<i64: 9, 8, 8>}, {transform_indices = @transform_2, window_bounds = array<i64: 1, 8, 1>}, {transform_indices = @transform_3, window_bounds = array<i64: 1, 8, 1>}, {transform_indices = @transform_4, window_bounds = array<i64: 1, 8, 384>}]} {
    %c384_i32 = arith.constant 384 : i32
    %0 = arith.muli %arg1, %c384_i32 : i32
    %1 = tpu.assume_multiple %0, 128 : i32
    %c0_i32 = arith.constant 0 : i32
    %c0_i32_0 = arith.constant 0 : i32
    %2 = tpu.memref_slice %arg2[%arg0, %c0_i32_0, %1] : memref<2x8x512xf32, #tpu.memory_space<any>> -> memref<1x8x512xf32, #tpu.memory_space<any>>
    %3 = tpu.memref_squeeze %2 : memref<1x8x512xf32, #tpu.memory_space<any>> -> memref<8x512xf32, #tpu.memory_space<any>>
    %4 = tpu.memref_slice %arg8[%c0_i32] : memref<1x!tpu.dma_semaphore, #tpu.memory_space<semaphore_mem>> -> memref<1x!tpu.dma_semaphore, #tpu.memory_space<semaphore_mem>>
    %5 = tpu.memref_squeeze %4 : memref<1x!tpu.dma_semaphore, #tpu.memory_space<semaphore_mem>> -> memref<!tpu.dma_semaphore, #tpu.memory_space<semaphore_mem>>
    tpu.enqueue_dma source(%3 : memref<8x512xf32, #tpu.memory_space<any>>) target(%arg7 : memref<8x512xf32, #tpu.memory_space<vmem>>) target_semaphore(%5 : memref<!tpu.dma_semaphore, #tpu.memory_space<semaphore_mem>>)
    %c0_i32_1 = arith.constant 0 : i32
    %c0_i32_2 = arith.constant 0 : i32
    %6 = tpu.memref_slice %arg2[%arg0, %c0_i32_2, %1] : memref<2x8x512xf32, #tpu.memory_space<any>> -> memref<1x8x512xf32, #tpu.memory_space<any>>
    %7 = tpu.memref_squeeze %6 : memref<1x8x512xf32, #tpu.memory_space<any>> -> memref<8x512xf32, #tpu.memory_space<any>>
    %8 = tpu.memref_slice %arg8[%c0_i32_1] : memref<1x!tpu.dma_semaphore, #tpu.memory_space<semaphore_mem>> -> memref<1x!tpu.dma_semaphore, #tpu.memory_space<semaphore_mem>>
    %9 = tpu.memref_squeeze %8 : memref<1x!tpu.dma_semaphore, #tpu.memory_space<semaphore_mem>> -> memref<!tpu.dma_semaphore, #tpu.memory_space<semaphore_mem>>
    tpu.wait_dma2 semaphore(%9 : memref<!tpu.dma_semaphore, #tpu.memory_space<semaphore_mem>>) src(%7 : memref<8x512xf32, #tpu.memory_space<any>>) dst(%arg7 : memref<8x512xf32, #tpu.memory_space<vmem>>)
    %cst = arith.constant 0.000000e+00 : f32
    %10 = vector.broadcast %cst : f32 to vector<8x384xf32>
    %c0 = arith.constant 0 : index
    %c0_3 = arith.constant 0 : index
    %11 = vector.load %arg7[%c0, %c0_3] : memref<8x512xf32, #tpu.memory_space<vmem>>, vector<8x384xf32>
    %c0_4 = arith.constant 0 : index
    %c0_5 = arith.constant 0 : index
    %c0_6 = arith.constant 0 : index
    %12 = vector.load %arg3[%c0_4, %c0_5, %c0_6] : memref<9x8x8xf32, #tpu.memory_space<vmem>>, vector<1x8x8xf32>
    %13 = vector.shape_cast %12 : vector<1x8x8xf32> to vector<8x8xf32>
    %cst_7 = arith.constant dense<0.000000e+00> : vector<8x384xf32>
    %14 = tpu.matmul %13, %11, %cst_7 {dimension_numbers = #tpu.dot_dimension_numbers<[1], [0], [0], [1], [0, 0, 1, 1], [], []>} : vector<8x8xf32>, vector<8x384xf32>, vector<8x384xf32> -> vector<8x384xf32>
    %15 = arith.addf %10, %14 : vector<8x384xf32>
    %c0_8 = arith.constant 0 : index
    %c1 = arith.constant 1 : index
    %16 = vector.load %arg7[%c0_8, %c1] : memref<8x512xf32, #tpu.memory_space<vmem>>, vector<8x384xf32>
    %c1_9 = arith.constant 1 : index
    %c0_10 = arith.constant 0 : index
    %c0_11 = arith.constant 0 : index
    %17 = vector.load %arg3[%c1_9, %c0_10, %c0_11] : memref<9x8x8xf32, #tpu.memory_space<vmem>>, vector<1x8x8xf32>
    %18 = vector.shape_cast %17 : vector<1x8x8xf32> to vector<8x8xf32>
    %cst_12 = arith.constant dense<0.000000e+00> : vector<8x384xf32>
    %19 = tpu.matmul %18, %16, %cst_12 {dimension_numbers = #tpu.dot_dimension_numbers<[1], [0], [0], [1], [0, 0, 1, 1], [], []>} : vector<8x8xf32>, vector<8x384xf32>, vector<8x384xf32> -> vector<8x384xf32>
    %20 = arith.addf %15, %19 : vector<8x384xf32>
    %c0_13 = arith.constant 0 : index
    %c2 = arith.constant 2 : index
    %21 = vector.load %arg7[%c0_13, %c2] : memref<8x512xf32, #tpu.memory_space<vmem>>, vector<8x384xf32>
    %c2_14 = arith.constant 2 : index
    %c0_15 = arith.constant 0 : index
    %c0_16 = arith.constant 0 : index
    %22 = vector.load %arg3[%c2_14, %c0_15, %c0_16] : memref<9x8x8xf32, #tpu.memory_space<vmem>>, vector<1x8x8xf32>
    %23 = vector.shape_cast %22 : vector<1x8x8xf32> to vector<8x8xf32>
    %cst_17 = arith.constant dense<0.000000e+00> : vector<8x384xf32>
    %24 = tpu.matmul %23, %21, %cst_17 {dimension_numbers = #tpu.dot_dimension_numbers<[1], [0], [0], [1], [0, 0, 1, 1], [], []>} : vector<8x8xf32>, vector<8x384xf32>, vector<8x384xf32> -> vector<8x384xf32>
    %25 = arith.addf %20, %24 : vector<8x384xf32>
    %c0_18 = arith.constant 0 : index
    %c18 = arith.constant 18 : index
    %26 = vector.load %arg7[%c0_18, %c18] : memref<8x512xf32, #tpu.memory_space<vmem>>, vector<8x384xf32>
    %c3 = arith.constant 3 : index
    %c0_19 = arith.constant 0 : index
    %c0_20 = arith.constant 0 : index
    %27 = vector.load %arg3[%c3, %c0_19, %c0_20] : memref<9x8x8xf32, #tpu.memory_space<vmem>>, vector<1x8x8xf32>
    %28 = vector.shape_cast %27 : vector<1x8x8xf32> to vector<8x8xf32>
    %cst_21 = arith.constant dense<0.000000e+00> : vector<8x384xf32>
    %29 = tpu.matmul %28, %26, %cst_21 {dimension_numbers = #tpu.dot_dimension_numbers<[1], [0], [0], [1], [0, 0, 1, 1], [], []>} : vector<8x8xf32>, vector<8x384xf32>, vector<8x384xf32> -> vector<8x384xf32>
    %30 = arith.addf %25, %29 : vector<8x384xf32>
    %c0_22 = arith.constant 0 : index
    %c19 = arith.constant 19 : index
    %31 = vector.load %arg7[%c0_22, %c19] : memref<8x512xf32, #tpu.memory_space<vmem>>, vector<8x384xf32>
    %c4 = arith.constant 4 : index
    %c0_23 = arith.constant 0 : index
    %c0_24 = arith.constant 0 : index
    %32 = vector.load %arg3[%c4, %c0_23, %c0_24] : memref<9x8x8xf32, #tpu.memory_space<vmem>>, vector<1x8x8xf32>
    %33 = vector.shape_cast %32 : vector<1x8x8xf32> to vector<8x8xf32>
    %cst_25 = arith.constant dense<0.000000e+00> : vector<8x384xf32>
    %34 = tpu.matmul %33, %31, %cst_25 {dimension_numbers = #tpu.dot_dimension_numbers<[1], [0], [0], [1], [0, 0, 1, 1], [], []>} : vector<8x8xf32>, vector<8x384xf32>, vector<8x384xf32> -> vector<8x384xf32>
    %35 = arith.addf %30, %34 : vector<8x384xf32>
    %c0_26 = arith.constant 0 : index
    %c20 = arith.constant 20 : index
    %36 = vector.load %arg7[%c0_26, %c20] : memref<8x512xf32, #tpu.memory_space<vmem>>, vector<8x384xf32>
    %c5 = arith.constant 5 : index
    %c0_27 = arith.constant 0 : index
    %c0_28 = arith.constant 0 : index
    %37 = vector.load %arg3[%c5, %c0_27, %c0_28] : memref<9x8x8xf32, #tpu.memory_space<vmem>>, vector<1x8x8xf32>
    %38 = vector.shape_cast %37 : vector<1x8x8xf32> to vector<8x8xf32>
    %cst_29 = arith.constant dense<0.000000e+00> : vector<8x384xf32>
    %39 = tpu.matmul %38, %36, %cst_29 {dimension_numbers = #tpu.dot_dimension_numbers<[1], [0], [0], [1], [0, 0, 1, 1], [], []>} : vector<8x8xf32>, vector<8x384xf32>, vector<8x384xf32> -> vector<8x384xf32>
    %40 = arith.addf %35, %39 : vector<8x384xf32>
    %c0_30 = arith.constant 0 : index
    %c36 = arith.constant 36 : index
    %41 = vector.load %arg7[%c0_30, %c36] : memref<8x512xf32, #tpu.memory_space<vmem>>, vector<8x384xf32>
    %c6 = arith.constant 6 : index
    %c0_31 = arith.constant 0 : index
    %c0_32 = arith.constant 0 : index
    %42 = vector.load %arg3[%c6, %c0_31, %c0_32] : memref<9x8x8xf32, #tpu.memory_space<vmem>>, vector<1x8x8xf32>
    %43 = vector.shape_cast %42 : vector<1x8x8xf32> to vector<8x8xf32>
    %cst_33 = arith.constant dense<0.000000e+00> : vector<8x384xf32>
    %44 = tpu.matmul %43, %41, %cst_33 {dimension_numbers = #tpu.dot_dimension_numbers<[1], [0], [0], [1], [0, 0, 1, 1], [], []>} : vector<8x8xf32>, vector<8x384xf32>, vector<8x384xf32> -> vector<8x384xf32>
    %45 = arith.addf %40, %44 : vector<8x384xf32>
    %c0_34 = arith.constant 0 : index
    %c37 = arith.constant 37 : index
    %46 = vector.load %arg7[%c0_34, %c37] : memref<8x512xf32, #tpu.memory_space<vmem>>, vector<8x384xf32>
    %c7 = arith.constant 7 : index
    %c0_35 = arith.constant 0 : index
    %c0_36 = arith.constant 0 : index
    %47 = vector.load %arg3[%c7, %c0_35, %c0_36] : memref<9x8x8xf32, #tpu.memory_space<vmem>>, vector<1x8x8xf32>
    %48 = vector.shape_cast %47 : vector<1x8x8xf32> to vector<8x8xf32>
    %cst_37 = arith.constant dense<0.000000e+00> : vector<8x384xf32>
    %49 = tpu.matmul %48, %46, %cst_37 {dimension_numbers = #tpu.dot_dimension_numbers<[1], [0], [0], [1], [0, 0, 1, 1], [], []>} : vector<8x8xf32>, vector<8x384xf32>, vector<8x384xf32> -> vector<8x384xf32>
    %50 = arith.addf %45, %49 : vector<8x384xf32>
    %c0_38 = arith.constant 0 : index
    %c38 = arith.constant 38 : index
    %51 = vector.load %arg7[%c0_38, %c38] : memref<8x512xf32, #tpu.memory_space<vmem>>, vector<8x384xf32>
    %c8 = arith.constant 8 : index
    %c0_39 = arith.constant 0 : index
    %c0_40 = arith.constant 0 : index
    %52 = vector.load %arg3[%c8, %c0_39, %c0_40] : memref<9x8x8xf32, #tpu.memory_space<vmem>>, vector<1x8x8xf32>
    %53 = vector.shape_cast %52 : vector<1x8x8xf32> to vector<8x8xf32>
    %cst_41 = arith.constant dense<0.000000e+00> : vector<8x384xf32>
    %54 = tpu.matmul %53, %51, %cst_41 {dimension_numbers = #tpu.dot_dimension_numbers<[1], [0], [0], [1], [0, 0, 1, 1], [], []>} : vector<8x8xf32>, vector<8x384xf32>, vector<8x384xf32> -> vector<8x384xf32>
    %55 = arith.addf %50, %54 : vector<8x384xf32>
    %c0_42 = arith.constant 0 : index
    %c0_43 = arith.constant 0 : index
    %c0_44 = arith.constant 0 : index
    %56 = vector.load %arg4[%c0_42, %c0_43, %c0_44] : memref<1x8x1xf32, #tpu.memory_space<vmem>>, vector<1x8x1xf32>
    %57 = vector.shape_cast %56 : vector<1x8x1xf32> to vector<8x1xf32>
    %58 = vector.broadcast %57 : vector<8x1xf32> to vector<8x384xf32>
    %59 = arith.mulf %55, %58 : vector<8x384xf32>
    %c0_45 = arith.constant 0 : index
    %c0_46 = arith.constant 0 : index
    %c0_47 = arith.constant 0 : index
    %60 = vector.load %arg5[%c0_45, %c0_46, %c0_47] : memref<1x8x1xf32, #tpu.memory_space<vmem>>, vector<1x8x1xf32>
    %61 = vector.shape_cast %60 : vector<1x8x1xf32> to vector<8x1xf32>
    %62 = vector.broadcast %61 : vector<8x1xf32> to vector<8x384xf32>
    %63 = arith.addf %59, %62 : vector<8x384xf32>
    %c0_48 = arith.constant 0 : index
    %c0_49 = arith.constant 0 : index
    %c0_50 = arith.constant 0 : index
    %64 = vector.load %arg6[%c0_48, %c0_49, %c0_50] : memref<1x8x384xf32, #tpu.memory_space<vmem>>, vector<1x8x384xf32>
    %65 = vector.shape_cast %64 : vector<1x8x384xf32> to vector<8x384xf32>
    %66 = vector.shape_cast %63 : vector<8x384xf32> to vector<1x8x384xf32>
    tpu.vector_store %arg6[%c0_48, %c0_49, %c0_50], %66 {strides = array<i32>} : memref<1x8x384xf32, #tpu.memory_space<vmem>>, vector<1x8x384xf32>,
    return
  }
  func.func @transform_1(%arg0: i32, %arg1: i32) -> (i32, i32, i32) {
    %c0_i32 = arith.constant 0 : i32
    %c0_i32_0 = arith.constant 0 : i32
    %c0_i32_1 = arith.constant 0 : i32
    %c0_i32_2 = arith.constant 0 : i32
    return %c0_i32, %c0_i32_0, %c0_i32_1 : i32, i32, i32
  }
  func.func @transform_2(%arg0: i32, %arg1: i32) -> (i32, i32, i32) {
    %c0_i32 = arith.constant 0 : i32
    %c0_i32_0 = arith.constant 0 : i32
    %c0_i32_1 = arith.constant 0 : i32
    return %arg0, %c0_i32, %c0_i32_0 : i32, i32, i32
  }
  func.func @transform_3(%arg0: i32, %arg1: i32) -> (i32, i32, i32) {
    %c0_i32 = arith.constant 0 : i32
    %c0_i32_0 = arith.constant 0 : i32
    %c0_i32_1 = arith.constant 0 : i32
    return %arg0, %c0_i32, %c0_i32_0 : i32, i32, i32
  }
  func.func @transform_4(%arg0: i32, %arg1: i32) -> (i32, i32, i32) {
    %c0_i32 = arith.constant 0 : i32
    %c0_i32_0 = arith.constant 0 : i32
    return %arg0, %c0_i32, %arg1 : i32, i32, i32
  }
}

</mosaic_0001>

<llo_original>
// kernel: moe_layer_forward.1
$region0: #{moe_layer_forward.1}
  #allocation0 [shape = 'u32[]', space=smem, size = 0x4, offset = 0x4, fixed_abs, tag = 'smem constant byte address 0x4 - core index']
  #allocation1 [shape = 'u32[144,128]{1,0:T(1,128)}', space=vmem, size = 0x12000, scoped, tag = 'internal scratch']
  #allocation2 [shape = 'f32[8,512]{1,0:T(8,128)}', space=vmem, size = 0x4000, scoped, tag = 'scratch operand']
  #allocation3 [shape = 's32[1]{0}', space=sflag, size = 0x4, scoped, tag = 'scratch operand']
  #allocation4 [shape = 's32[]', space=sflag, size = 0x4, offset = 0, fixed_abs, tag = 'sflag constant byte address 0x0 - dummy sync flag']
  %s0 = inlined_call_operand.vmem [shape: f32[2,8,512], index: 0, kind: input, shape index: {}]
  %s1 = inlined_call_operand.vmem [shape: f32[9,8,8], index: 1, kind: input, shape index: {}]
  %s2 = inlined_call_operand.vmem [shape: f32[2,8,1], index: 2, kind: input, shape index: {}]
  %s3 = inlined_call_operand.vmem [shape: f32[2,8,1], index: 3, kind: input, shape index: {}]
  %s4 = inlined_call_operand.vmem [shape: f32[2,8,384], index: 4, kind: output, shape index: {}]
  %s5 = sld [smem:[#allocation0]]
  $region79: #{moe_layer_forward.1} parent=0
    _
  %s7 = ssub.s32 1, %s5
  %s8 = scalar_select 0, %s7, %s5
  loop: start=0, step=1, limit=4
  $region2: #{moe_layer_forward.1} parent=0 // loop_pre_header
    _
  $region3: #{moe_layer_forward.1} parent=0 // loop_header
    %s10 = sphi 0, %s14
    %p11 = scmp.ge.s32.totalorder %s10, 4
    %s17 = sphi 0, %s29
    %s18 = sphi 0, %s25
    %s19 = sphi 0, %s17
    %s20 = sphi 0, %s18
    %s21 = sphi 0, %s19
    %s22 = sphi 0, %s20
    %s30 = sphi 0, %s30
    %s32 = sphi 0, %s30
    %s33 = sphi 0, %s32
    %s47 = sphi 0, %s33
    %s53 = sphi 0, %s55
    %s56 = sphi 0, %s53
    %s57 = sphi 0, %s56
    %s73 = sphi 0, %s57
    %s79 = sphi 0, %s81
    %s82 = sphi 0, %s79
    %s83 = sphi 0, %s82
    %s99 = sphi 0, %s83
    %s107 = sphi 0, %s109
    %s110 = sphi 0, %s107
    %s111 = sphi 0, %s110
    %s127 = sphi 0, %s111
  $region4: #{moe_layer_forward.1} parent=0 // loop_header_branch
    %13 = sbr.rel (%p11) target = $region8
  $region5: #{moe_layer_forward.1} parent=0 // loop_body
    %s15 = ssub.s32 %s10, 1
    %s16 = ssub.s32 %s10, 2
    %s23 = sadd.s32 1, %s18
    %p24 = scmp.ge.s32.totalorder %s23, 1
    %s25 = scalar_select %p24, 0, %s23
    %s26 = sadd.s32 1, %s17
    %s27 = scalar_select %p24, %s26, %s17
    %p28 = scmp.ge.s32.totalorder %s27, 2
    %s29 = scalar_select %p28, 0, %s27
    %s31 = sadd.s32 %s30, 1
    %p34 = scmp.eq.s32.totalorder %s10, 1
    %p35 = scmp.ne.s32.totalorder %s30, %s32
    %p36 = scmp.eq.s32.totalorder %s10, 0
    %p37 = por %p35, %p36
    %p38 = scmp.ne.s32.totalorder %s30, %s32
    %p39 = scmp.eq.s32.totalorder %s15, 1
    %p40 = por %p38, %p39
    %p41 = scmp.ne.s32.totalorder %s32, %s33
    %p42 = scmp.eq.s32.totalorder %s15, 0
    %p43 = por %p41, %p42
    %p44 = scmp.ne.s32.totalorder %s32, %s33
    %p45 = scmp.eq.s32.totalorder %s16, 1
    %p46 = por %p44, %p45
    %p48 = scmp.ne.s32.totalorder %s33, %s47
    %p49 = scmp.eq.s32.totalorder %s16, 0
    %p50 = por %p48, %p49
    %s51 = ssub.s32 %s17, %s29
    %p52 = scmp.eq.s32.totalorder %s51, 0
    %s54 = sadd.s32 %s53, 1
    %s55 = scalar_select %p52, %s53, %s54
    %p58 = pneg %p52
    %p59 = scmp.eq.s32.totalorder %s10, 1
    %p60 = por %p58, %p59
    %p61 = scmp.ne.s32.totalorder %s53, %s56
    %p62 = scmp.eq.s32.totalorder %s10, 0
    %p63 = por %p61, %p62
    %p64 = scmp.ne.s32.totalorder %s53, %s56
    %p65 = scmp.eq.s32.totalorder %s15, 1
    %p66 = por %p64, %p65
    %p67 = scmp.ne.s32.totalorder %s56, %s57
    %p68 = scmp.eq.s32.totalorder %s15, 0
    %p69 = por %p67, %p68
    %p70 = scmp.ne.s32.totalorder %s56, %s57
    %p71 = scmp.eq.s32.totalorder %s16, 1
    %p72 = por %p70, %p71
    %p74 = scmp.ne.s32.totalorder %s57, %s73
    %p75 = scmp.eq.s32.totalorder %s16, 0
    %p76 = por %p74, %p75
    %s77 = ssub.s32 %s17, %s29
    %p78 = scmp.eq.s32.totalorder %s77, 0
    %s80 = sadd.s32 %s79, 1
    %s81 = scalar_select %p78, %s79, %s80
    %p84 = pneg %p78
    %p85 = scmp.eq.s32.totalorder %s10, 1
    %p86 = por %p84, %p85
    %p87 = scmp.ne.s32.totalorder %s79, %s82
    %p88 = scmp.eq.s32.totalorder %s10, 0
    %p89 = por %p87, %p88
    %p90 = scmp.ne.s32.totalorder %s79, %s82
    %p91 = scmp.eq.s32.totalorder %s15, 1
    %p92 = por %p90, %p91
    %p93 = scmp.ne.s32.totalorder %s82, %s83
    %p94 = scmp.eq.s32.totalorder %s15, 0
    %p95 = por %p93, %p94
    %p96 = scmp.ne.s32.totalorder %s82, %s83
    %p97 = scmp.eq.s32.totalorder %s16, 1
    %p98 = por %p96, %p97
    %p100 = scmp.ne.s32.totalorder %s83, %s99
    %p101 = scmp.eq.s32.totalorder %s16, 0
    %p102 = por %p100, %p101
    %s103 = ssub.s32 %s17, %s29
    %s104 = ssub.s32 %s18, %s25
    %s105 = sor.u32 %s103, %s104
    %p106 = scmp.eq.s32.totalorder %s105, 0
    %s108 = sadd.s32 %s107, 1
    %s109 = scalar_select %p106, %s107, %s108
    %p112 = pneg %p106
    %p113 = scmp.eq.s32.totalorder %s10, 1
    %p114 = por %p112, %p113
    %p115 = scmp.ne.s32.totalorder %s107, %s110
    %p116 = scmp.eq.s32.totalorder %s10, 0
    %p117 = por %p115, %p116
    %p118 = scmp.ne.s32.totalorder %s107, %s110
    %p119 = scmp.eq.s32.totalorder %s15, 1
    %p120 = por %p118, %p119
    %p121 = scmp.ne.s32.totalorder %s110, %s111
    %p122 = scmp.eq.s32.totalorder %s15, 0
    %p123 = por %p121, %p122
    %p124 = scmp.ne.s32.totalorder %s110, %s111
    %p125 = scmp.eq.s32.totalorder %s16, 1
    %p126 = por %p124, %p125
    %p128 = scmp.ne.s32.totalorder %s111, %s127
    %p129 = scmp.eq.s32.totalorder %s16, 0
    %p130 = por %p128, %p129
    %p131 = scmp.le.s32.totalorder 1, %s10
    %p132 = scmp.lt.s32.totalorder %s10, 3
    %p133 = pnand %p131, %p132
    %p134 = pneg %p133
    // Predicated region
    $region9: #{moe_layer_forward.1} parent=5 // pred_check
      _
    $region10: #{moe_layer_forward.1} parent=5 // pred_check_branch
      %136 = sbr.rel (%p133) target = $region12
    $region11: #{moe_layer_forward.1} parent=5 // pred_region
      %s137 = ssub.s32 %s10, 1
      // Predicated region
      $region13: #{moe_layer_forward.1} parent=11 // pred_check
        %p138 = pneg %p43
      $region14: #{moe_layer_forward.1} parent=11 // pred_check_branch
        %140 = sbr.rel (%p138) target = $region16
      $region15: #{moe_layer_forward.1} parent=11 // pred_region
        _
      $region16: #{moe_layer_forward.1} parent=11 // pred_fallthru
        _
    $region12: #{moe_layer_forward.1} parent=5 // pred_fallthru
      _
    %p141 = scmp.lt.s32.totalorder %s10, 2
    // Predicated region
    $region17: #{moe_layer_forward.1} parent=5 // pred_check
      %p142 = pneg %p141
    $region18: #{moe_layer_forward.1} parent=5 // pred_check_branch
      %144 = sbr.rel (%p142) target = $region20
    $region19: #{moe_layer_forward.1} parent=5 // pred_region
      // Predicated region
      $region21: #{moe_layer_forward.1} parent=19 // pred_check
        %p145 = pneg %p63
      $region22: #{moe_layer_forward.1} parent=19 // pred_check_branch
        %147 = sbr.rel (%p145) target = $region24
      $region23: #{moe_layer_forward.1} parent=19 // pred_region
        %p148 = scmp.lt.s32.totalorder %s17, 1
        %s149 = scalar_select %p148, %s17, 1
        %s150 = smul.addr %s149, 8
        %s151 = scalar_lea.vmem %s2, %s150
      $region24: #{moe_layer_forward.1} parent=19 // pred_fallthru
        _
      // Predicated region
      $region25: #{moe_layer_forward.1} parent=19 // pred_check
        %p152 = pneg %p89
      $region26: #{moe_layer_forward.1} parent=19 // pred_check_branch
        %154 = sbr.rel (%p152) target = $region28
      $region27: #{moe_layer_forward.1} parent=19 // pred_region
        %p155 = scmp.lt.s32.totalorder %s17, 1
        %s156 = scalar_select %p155, %s17, 1
        %s157 = smul.addr %s156, 8
        %s158 = scalar_lea.vmem %s3, %s157
      $region28: #{moe_layer_forward.1} parent=19 // pred_fallthru
        _
    $region20: #{moe_layer_forward.1} parent=5 // pred_fallthru
      _
    %p159 = scmp.le.s32.totalorder 1, %s10
    %p160 = scmp.lt.s32.totalorder %s10, 3
    %p161 = pnand %p159, %p160
    %p162 = pneg %p161
    // Predicated region
    $region29: #{moe_layer_forward.1} parent=5 // pred_check
      _
    $region30: #{moe_layer_forward.1} parent=5 // pred_check_branch
      %164 = sbr.rel (%p161) target = $region32
    $region31: #{moe_layer_forward.1} parent=5 // pred_region
      %s165 = ssub.s32 %s10, 1
      %p166 = pneg %p43
      %p167 = pneg %p40
      %p168 = scmp.lt.s32.totalorder %s19, 1
      %s169 = scalar_select %p168, %s19, 1
      %s170 = smul.addr %s169, 8
      %s171 = scalar_lea.vmem %s2, %s170
      %p172 = pneg %p69
      %p173 = pneg %p66
      %p174 = scmp.lt.s32.totalorder %s19, 1
      %s175 = scalar_select %p174, %s19, 1
      %s176 = smul.addr %s175, 8
      %s177 = scalar_lea.vmem %s3, %s176
      %p178 = pneg %p95
      %p179 = pneg %p92
      %p180 = pneg %p123
      %p181 = pneg %p120
      %s182 = smul.u32 3, %s20
      %p183 = scmp.lt.s32.totalorder %s19, 1
      %s184 = scalar_select %p183, %s19, 1
      %p185 = scmp.lt.s32.totalorder %s182, 2
      %s186 = scalar_select %p185, %s182, 2
      %s187 = smul.addr %s184, 3
      %s188 = sadd.s32 %s186, %s187
      %s189 = smul.addr %s188, 8
      %s190 = scalar_lea.vmem %s4, %s189
      %p191 = scmp.lt.s32.totalorder %s19, 1
      %s192 = scalar_select %p191, %s19, 1
      %s193 = smul.addr %s192, 8
      %s194 = scalar_lea.vmem %s2, %s193
      %p195 = scmp.lt.s32.totalorder %s19, 1
      %s196 = scalar_select %p195, %s19, 1
      %s197 = smul.addr %s196, 8
      %s198 = scalar_lea.vmem %s3, %s197
      %s199 = smul.u32 3, %s20
      %p200 = scmp.lt.s32.totalorder %s19, 1
      %s201 = scalar_select %p200, %s19, 1
      %p202 = scmp.lt.s32.totalorder %s199, 2
      %s203 = scalar_select %p202, %s199, 2
      %s204 = smul.addr %s201, 3
      %s205 = sadd.s32 %s203, %s204
      %s206 = smul.addr %s205, 8
      %s207 = scalar_lea.vmem %s4, %s206
      %s208 = smul.u32 3, %s20
      %s209 = smul.u32 %s20, 384
      %s210 = sshra.s32 %s209, 7
      %s211 = sand.u32 %s209, 127
      %s212 = smul.u32 %s19, 4
      %s213 = sadd.s32 %s210, %s212
      %s214 = smul.addr %s213, 8
      %s215 = scalar_lea.vmem %s0, %s214
      %p217 = scmp.lt.u32.totalorder 32, 8
      %p218 = pneg %p217
      // Predicated region
      $region33: #{moe_layer_forward.1} parent=31 // pred_check
        _
      $region34: #{moe_layer_forward.1} parent=31 // pred_check_branch
        %220 = sbr.rel (%p217) target = $region36
      $region35: #{moe_layer_forward.1} parent=31 // pred_region
        %s235 = sand.u32 32, 7
        %p236 = scmp.eq.s32.totalorder %s235, 0
        // Predicated region
        $region48: #{moe_layer_forward.1} parent=35 // pred_check
          %p237 = pneg %p236
        $region49: #{moe_layer_forward.1} parent=35 // pred_check_branch
          %239 = sbr.rel (%p237) target = $region51
        $region50: #{moe_layer_forward.1} parent=35 // pred_region
          loop: start=0, step=1, limit=1
          $region52: #{moe_layer_forward.1} parent=50 // loop_pre_header
            _
          $region53: #{moe_layer_forward.1} parent=50 // loop_header
            %s241 = sphi 0, %s245
            %p242 = scmp.ge.s32.totalorder %s241, 1
            %s246 = sphi %s215, %s215
            %s247 = sphi [#allocation2], [#allocation2]
          $region54: #{moe_layer_forward.1} parent=50 // loop_header_branch
            %244 = sbr.rel (%p242) target = $region58
          $region55: #{moe_layer_forward.1} parent=50 // loop_body
            %v248 = vld [vmem:[%s246] sm:$0xff]
            %249 = vst [vmem:[%s247] sm:$0xff] %v248
            %v250 = vld [vmem:[%s246 + $0x8] sm:$0xff]
            %251 = vst [vmem:[%s247 + $0x8] sm:$0xff] %v250
            %v252 = vld [vmem:[%s246 + $0x10] sm:$0xff]
            %253 = vst [vmem:[%s247 + $0x10] sm:$0xff] %v252
            %v254 = vld [vmem:[%s246 + $0x18] sm:$0xff]
            %255 = vst [vmem:[%s247 + $0x18] sm:$0xff] %v254
          $region56: #{moe_layer_forward.1} parent=50 // loop_footer
            %s245 = sadd.s32 1, %s241
          $region57: #{moe_layer_forward.1} parent=50 // loop_footer_branch
            %240 = sbr.rel target = $region53
          $region58: #{moe_layer_forward.1} parent=50 // loop_exit
            _
        $region51: #{moe_layer_forward.1} parent=35 // pred_fallthru
          _
        %p256 = pneg %p236
        // Predicated region
        $region59: #{moe_layer_forward.1} parent=35 // pred_check
          _
        $region60: #{moe_layer_forward.1} parent=35 // pred_check_branch
          %258 = sbr.rel (%p236) target = $region62
        $region61: #{moe_layer_forward.1} parent=35 // pred_region
          %s259 = sand.u32 32, 7
        $region62: #{moe_layer_forward.1} parent=35 // pred_fallthru
          _
      $region36: #{moe_layer_forward.1} parent=31 // pred_fallthru
        _
      // Predicated region
      $region37: #{moe_layer_forward.1} parent=31 // pred_check
        %p221 = pneg %p217
      $region38: #{moe_layer_forward.1} parent=31 // pred_check_branch
        %223 = sbr.rel (%p221) target = $region40
      $region39: #{moe_layer_forward.1} parent=31 // pred_region
        %s224 = sshllo.u32 0, 32
        loop: start=0, step=1, limit=1
        $region41: #{moe_layer_forward.1} parent=39 // loop_pre_header
          _
        $region42: #{moe_layer_forward.1} parent=39 // loop_header
          %s226 = sphi 0, %s230
          %p227 = scmp.ge.s32.totalorder %s226, 1
          %s231 = sphi %s215, %s215
          %s232 = sphi [#allocation2], [#allocation2]
        $region43: #{moe_layer_forward.1} parent=39 // loop_header_branch
          %229 = sbr.rel (%p227) target = $region47
        $region44: #{moe_layer_forward.1} parent=39 // loop_body
          %v233 = vld [vmem:[%s231] sm:%s224]
          %234 = vst [vmem:[%s232] sm:%s224] %v233
        $region45: #{moe_layer_forward.1} parent=39 // loop_footer
          %s230 = sadd.s32 1, %s226
        $region46: #{moe_layer_forward.1} parent=39 // loop_footer_branch
          %225 = sbr.rel target = $region42
        $region47: #{moe_layer_forward.1} parent=39 // loop_exit
          _
      $region40: #{moe_layer_forward.1} parent=31 // pred_fallthru
        _
      // Predicated region
      $region63: #{moe_layer_forward.1} parent=31 // pred_check
        _
      $region64: #{moe_layer_forward.1} parent=31 // pred_check_branch
        %262 = sbr.rel (0) target = $region66
      $region65: #{moe_layer_forward.1} parent=31 // pred_region
        %263 = vsyncadd [#allocation3], 512
      $region66: #{moe_layer_forward.1} parent=31 // pred_fallthru
        _
      %s264 = smul.u32 8, 1
      %s265 = smul.u32 %s264, 4
      %s266 = sshll.u32 %s265, 4
      %267 = dma.done [#allocation3], %s266
      %v268 = vld [vmem:[#allocation2] sm:$0xff]
      %v269 = vld [vmem:[#allocation2 + $0x8] sm:$0xff]
      %v270 = vld [vmem:[#allocation2 + $0x10] sm:$0xff]
      %v271 = vld [vmem:[%s1] sm:$0xff]
      %v272 = vld [vmem:[#allocation2] sm:$0xff]
      %v273 = vld [vmem:[#allocation2 + $0x8] sm:$0xff]
      %v274 = vld [vmem:[#allocation2 + $0x10] sm:$0xff]
      %v275 = vld [vmem:[#allocation2 + $0x18] sm:$0xff]
      %s276 = scalar_lea.vmem %s1, 8
      %v277 = vld [vmem:[%s276] sm:$0xff]
      %282 = vrot.lane.b32.xlu0 %v272, 127
      %v283 = vpop.permute.xlu0 %282
      %284 = vrot.lane.b32.xlu0 %v273, 127
      %v285 = vpop.permute.xlu0 %284
      %286 = vrot.lane.b32.xlu0 %v274, 127
      %v287 = vpop.permute.xlu0 %286
      %288 = vrot.lane.b32.xlu0 %v275, 127
      %v289 = vpop.permute.xlu0 %288
      %vm290 = vcmask 1039360
      %v291 = vsel %vm290, %v283, %v285
      %v292 = vsel %vm290, %v285, %v287
      %v293 = vsel %vm290, %v287, %v289
      %vm297 = vcmask 64512
      %v299 = vsel %vm297, %v277, 0
      %301 = vmatprep.subr.mxu0 %v292
      %302 = vmatpush1.msra.mxu0 %v291
      %303 = vmatprep.subr.mxu0 0.0
      %304 = vmatpush1.msra.mxu0 0.0
      %305 = vmatprep.subr.mxu0 0.0
      %306 = vmatpush1.msra.mxu0 0.0
      %307 = vmatprep.subr.mxu0 0.0
      %308 = vmatpush1.msra.mxu0 0.0
      %309 = vmatprep.subr.mxu0 0.0
      %310 = vmatpush1.msra.mxu0 0.0
      %311 = vmatprep.subr.mxu0 0.0
      %312 = vmatpush1.msra.mxu0 0.0
      %313 = vmatprep.subr.mxu0 0.0
      %314 = vmatpush1.msra.mxu0 0.0
      %315 = vmatprep.subr.mxu0 0.0
      %316 = vmatpush1.msra.mxu0 0.0
      %317 = vmatprep.subr.mxu0 0.0
      %318 = vmatpush1.msra.mxu0 0.0
      %319 = vmatprep.subr.mxu0 0.0
      %320 = vmatpush1.msra.mxu0 0.0
      %321 = vmatprep.subr.mxu0 0.0
      %322 = vmatpush1.msra.mxu0 0.0
      %323 = vmatprep.subr.mxu0 0.0
      %324 = vmatpush1.msra.mxu0 0.0
      %325 = vmatprep.subr.mxu0 0.0
      %326 = vmatpush1.msra.mxu0 0.0
      %327 = vmatprep.subr.mxu0 0.0
      %328 = vmatpush1.msra.mxu0 0.0
      %329 = vmatprep.subr.mxu0 0.0
      %330 = vmatpush1.msra.mxu0 0.0
      %331 = vmatprep.subr.mxu0 0.0
      %332 = vmatpush1.msra.mxu0 0.0
      %333 = vmatprep.subr.mxu0 0.0
      %334 = vmatpush1.msra.mxu0 0.0
      %335 = vmatprep.subr.mxu0 0.0
      %336 = vmatpush1.msra.mxu0 0.0
      %337 = vmatprep.subr.mxu0 0.0
      %338 = vmatpush1.msra.mxu0 0.0
      %339 = vmatprep.subr.mxu0 0.0
      %340 = vmatpush1.msra.mxu0 0.0
      %341 = vmatprep.subr.mxu0 0.0
      %342 = vmatpush1.msra.mxu0 0.0
      %343 = vmatprep.subr.mxu0 0.0
      %344 = vmatpush1.msra.mxu0 0.0
      %345 = vmatprep.subr.mxu0 0.0
      %346 = vmatpush1.msra.mxu0 0.0
      %347 = vmatprep.subr.mxu0 0.0
      %348 = vmatpush1.msra.mxu0 0.0
      %349 = vmatprep.subr.mxu0 0.0
      %350 = vmatpush1.msra.mxu0 0.0
      %351 = vmatprep.subr.mxu0 0.0
      %352 = vmatpush1.msra.mxu0 0.0
      %353 = vmatprep.subr.mxu0 0.0
      %354 = vmatpush1.msra.mxu0 0.0
      %355 = vmatprep.subr.mxu0 0.0
      %356 = vmatpush1.msra.mxu0 0.0
      %357 = vmatprep.subr.mxu0 0.0
      %358 = vmatpush1.msra.mxu0 0.0
      %359 = vmatprep.subr.mxu0 0.0
      %360 = vmatpush1.msra.mxu0 0.0
      %361 = vmatprep.subr.mxu0 0.0
      %362 = vmatpush1.msra.mxu0 0.0
      %363 = vmatprep.subr.mxu0 0.0
      %364 = vmatpush1.msra.mxu0 0.0
      %365 = vmatprep.mubr.f32.mxu0 0.0
      %366 = vmatmul.mubr.f32.gmra.mrb[0].mxu0 %v299
      %v367 = vpop.f32.mrb[0].mxu0
      %v368 = vadd.f32 0.0, %v367
      %v369 = vpop.f32.mrb[0].mxu0
      %v370 = vadd.f32 0.0, %v369
      %371 = vdwg.mxu0
      %372 = vmatprep.subr.mxu0 0.0
      %373 = vmatpush1.msra.mxu0 %v293
      %374 = vmatprep.subr.mxu0 0.0
      %375 = vmatpush1.msra.mxu0 0.0
      %376 = vmatprep.subr.mxu0 0.0
      %377 = vmatpush1.msra.mxu0 0.0
      %378 = vmatprep.subr.mxu0 0.0
      %379 = vmatpush1.msra.mxu0 0.0
      %380 = vmatprep.subr.mxu0 0.0
      %381 = vmatpush1.msra.mxu0 0.0
      %382 = vmatprep.subr.mxu0 0.0
      %383 = vmatpush1.msra.mxu0 0.0
      %384 = vmatprep.subr.mxu0 0.0
      %385 = vmatpush1.msra.mxu0 0.0
      %386 = vmatprep.subr.mxu0 0.0
      %387 = vmatpush1.msra.mxu0 0.0
      %388 = vmatprep.subr.mxu0 0.0
      %389 = vmatpush1.msra.mxu0 0.0
      %390 = vmatprep.subr.mxu0 0.0
      %391 = vmatpush1.msra.mxu0 0.0
      %392 = vmatprep.subr.mxu0 0.0
      %393 = vmatpush1.msra.mxu0 0.0
      %394 = vmatprep.subr.mxu0 0.0
      %395 = vmatpush1.msra.mxu0 0.0
      %396 = vmatprep.subr.mxu0 0.0
      %397 = vmatpush1.msra.mxu0 0.0
      %398 = vmatprep.subr.mxu0 0.0
      %399 = vmatpush1.msra.mxu0 0.0
      %400 = vmatprep.subr.mxu0 0.0
      %401 = vmatpush1.msra.mxu0 0.0
      %402 = vmatprep.subr.mxu0 0.0
      %403 = vmatpush1.msra.mxu0 0.0
      %404 = vmatprep.subr.mxu0 0.0
      %405 = vmatpush1.msra.mxu0 0.0
      %406 = vmatprep.subr.mxu0 0.0
      %407 = vmatpush1.msra.mxu0 0.0
      %408 = vmatprep.subr.mxu0 0.0
      %409 = vmatpush1.msra.mxu0 0.0
      %410 = vmatprep.subr.mxu0 0.0
      %411 = vmatpush1.msra.mxu0 0.0
      %412 = vmatprep.subr.mxu0 0.0
      %413 = vmatpush1.msra.mxu0 0.0
      %414 = vmatprep.subr.mxu0 0.0
      %415 = vmatpush1.msra.mxu0 0.0
      %416 = vmatprep.subr.mxu0 0.0
      %417 = vmatpush1.msra.mxu0 0.0
      %418 = vmatprep.subr.mxu0 0.0
      %419 = vmatpush1.msra.mxu0 0.0
      %420 = vmatprep.subr.mxu0 0.0
      %421 = vmatpush1.msra.mxu0 0.0
      %422 = vmatprep.subr.mxu0 0.0
      %423 = vmatpush1.msra.mxu0 0.0
      %424 = vmatprep.subr.mxu0 0.0
      %425 = vmatpush1.msra.mxu0 0.0
      %426 = vmatprep.subr.mxu0 0.0
      %427 = vmatpush1.msra.mxu0 0.0
      %428 = vmatprep.subr.mxu0 0.0
      %429 = vmatpush1.msra.mxu0 0.0
      %430 = vmatprep.subr.mxu0 0.0
      %431 = vmatpush1.msra.mxu0 0.0
      %432 = vmatprep.subr.mxu0 0.0
      %433 = vmatpush1.msra.mxu0 0.0
      %434 = vmatprep.subr.mxu0 0.0
      %435 = vmatpush1.msra.mxu0 0.0
      %436 = vmatprep.mubr.f32.mxu0 0.0
      %437 = vmatmul.mubr.f32.gmra.mrb[0].mxu0 %v299
      %v438 = vpop.f32.mrb[0].mxu0
      %v439 = vadd.f32 0.0, %v438
      %v440 = vpop.f32.mrb[0].mxu0
      %441 = vdwg.mxu0
      %v443 = vsel %vm297, %v271, 0
      %445 = vmatprep.subr.mxu0 %v269
      %446 = vmatpush1.msra.mxu0 %v268
      %447 = vmatprep.subr.mxu0 0.0
      %448 = vmatpush1.msra.mxu0 0.0
      %449 = vmatprep.subr.mxu0 0.0
      %450 = vmatpush1.msra.mxu0 0.0
      %451 = vmatprep.subr.mxu0 0.0
      %452 = vmatpush1.msra.mxu0 0.0
      %453 = vmatprep.subr.mxu0 0.0
      %454 = vmatpush1.msra.mxu0 0.0
      %455 = vmatprep.subr.mxu0 0.0
      %456 = vmatpush1.msra.mxu0 0.0
      %457 = vmatprep.subr.mxu0 0.0
      %458 = vmatpush1.msra.mxu0 0.0
      %459 = vmatprep.subr.mxu0 0.0
      %460 = vmatpush1.msra.mxu0 0.0
      %461 = vmatprep.subr.mxu0 0.0
      %462 = vmatpush1.msra.mxu0 0.0
      %463 = vmatprep.subr.mxu0 0.0
      %464 = vmatpush1.msra.mxu0 0.0
      %465 = vmatprep.subr.mxu0 0.0
      %466 = vmatpush1.msra.mxu0 0.0
      %467 = vmatprep.subr.mxu0 0.0
      %468 = vmatpush1.msra.mxu0 0.0
      %469 = vmatprep.subr.mxu0 0.0
      %470 = vmatpush1.msra.mxu0 0.0
      %471 = vmatprep.subr.mxu0 0.0
      %472 = vmatpush1.msra.mxu0 0.0
      %473 = vmatprep.subr.mxu0 0.0
      %474 = vmatpush1.msra.mxu0 0.0
      %475 = vmatprep.subr.mxu0 0.0
      %476 = vmatpush1.msra.mxu0 0.0
      %477 = vmatprep.subr.mxu0 0.0
      %478 = vmatpush1.msra.mxu0 0.0
      %479 = vmatprep.subr.mxu0 0.0
      %480 = vmatpush1.msra.mxu0 0.0
      %481 = vmatprep.subr.mxu0 0.0
      %482 = vmatpush1.msra.mxu0 0.0
      %483 = vmatprep.subr.mxu0 0.0
      %484 = vmatpush1.msra.mxu0 0.0
      %485 = vmatprep.subr.mxu0 0.0
      %486 = vmatpush1.msra.mxu0 0.0
      %487 = vmatprep.subr.mxu0 0.0
      %488 = vmatpush1.msra.mxu0 0.0
      %489 = vmatprep.subr.mxu0 0.0
      %490 = vmatpush1.msra.mxu0 0.0
      %491 = vmatprep.subr.mxu0 0.0
      %492 = vmatpush1.msra.mxu0 0.0
      %493 = vmatprep.subr.mxu0 0.0
      %494 = vmatpush1.msra.mxu0 0.0
      %495 = vmatprep.subr.mxu0 0.0
      %496 = vmatpush1.msra.mxu0 0.0
      %497 = vmatprep.subr.mxu0 0.0
      %498 = vmatpush1.msra.mxu0 0.0
      %499 = vmatprep.subr.mxu0 0.0
      %500 = vmatpush1.msra.mxu0 0.0
      %501 = vmatprep.subr.mxu0 0.0
      %502 = vmatpush1.msra.mxu0 0.0
      %503 = vmatprep.subr.mxu0 0.0
      %504 = vmatpush1.msra.mxu0 0.0
      %505 = vmatprep.subr.mxu0 0.0
      %506 = vmatpush1.msra.mxu0 0.0
      %507 = vmatprep.subr.mxu0 0.0
      %508 = vmatpush1.msra.mxu0 0.0
      %509 = vmatprep.mubr.f32.mxu0 0.0
      %510 = vmatmul.mubr.f32.gmra.mrb[0].mxu0 %v443
      %v511 = vpop.f32.mrb[0].mxu0
      %v512 = vadd.f32 %v368, %v511
      %v513 = vpop.f32.mrb[0].mxu0
      %v514 = vadd.f32 %v370, %v513
      %515 = vdwg.mxu0
      %516 = vmatprep.subr.mxu0 0.0
      %517 = vmatpush1.msra.mxu0 %v270
      %518 = vmatprep.subr.mxu0 0.0
      %519 = vmatpush1.msra.mxu0 0.0
      %520 = vmatprep.subr.mxu0 0.0
      %521 = vmatpush1.msra.mxu0 0.0
      %522 = vmatprep.subr.mxu0 0.0
      %523 = vmatpush1.msra.mxu0 0.0
      %524 = vmatprep.subr.mxu0 0.0
      %525 = vmatpush1.msra.mxu0 0.0
      %526 = vmatprep.subr.mxu0 0.0
      %527 = vmatpush1.msra.mxu0 0.0
      %528 = vmatprep.subr.mxu0 0.0
      %529 = vmatpush1.msra.mxu0 0.0
      %530 = vmatprep.subr.mxu0 0.0
      %531 = vmatpush1.msra.mxu0 0.0
      %532 = vmatprep.subr.mxu0 0.0
      %533 = vmatpush1.msra.mxu0 0.0
      %534 = vmatprep.subr.mxu0 0.0
      %535 = vmatpush1.msra.mxu0 0.0
      %536 = vmatprep.subr.mxu0 0.0
      %537 = vmatpush1.msra.mxu0 0.0
      %538 = vmatprep.subr.mxu0 0.0
      %539 = vmatpush1.msra.mxu0 0.0
      %540 = vmatprep.subr.mxu0 0.0
      %541 = vmatpush1.msra.mxu0 0.0
      %542 = vmatprep.subr.mxu0 0.0
      %543 = vmatpush1.msra.mxu0 0.0
      %544 = vmatprep.subr.mxu0 0.0
      %545 = vmatpush1.msra.mxu0 0.0
      %546 = vmatprep.subr.mxu0 0.0
      %547 = vmatpush1.msra.mxu0 0.0
      %548 = vmatprep.subr.mxu0 0.0
      %549 = vmatpush1.msra.mxu0 0.0
      %550 = vmatprep.subr.mxu0 0.0
      %551 = vmatpush1.msra.mxu0 0.0
      %552 = vmatprep.subr.mxu0 0.0
      %553 = vmatpush1.msra.mxu0 0.0
      %554 = vmatprep.subr.mxu0 0.0
      %555 = vmatpush1.msra.mxu0 0.0
      %556 = vmatprep.subr.mxu0 0.0
      %557 = vmatpush1.msra.mxu0 0.0
      %558 = vmatprep.subr.mxu0 0.0
      %559 = vmatpush1.msra.mxu0 0.0
      %560 = vmatprep.subr.mxu0 0.0
      %561 = vmatpush1.msra.mxu0 0.0
      %562 = vmatprep.subr.mxu0 0.0
      %563 = vmatpush1.msra.mxu0 0.0
      %564 = vmatprep.subr.mxu0 0.0
      %565 = vmatpush1.msra.mxu0 0.0
      %566 = vmatprep.subr.mxu0 0.0
      %567 = vmatpush1.msra.mxu0 0.0
      %568 = vmatprep.subr.mxu0 0.0
      %569 = vmatpush1.msra.mxu0 0.0
      %570 = vmatprep.subr.mxu0 0.0
      %571 = vmatpush1.msra.mxu0 0.0
      %572 = vmatprep.subr.mxu0 0.0
      %573 = vmatpush1.msra.mxu0 0.0
      %574 = vmatprep.subr.mxu0 0.0
      %575 = vmatpush1.msra.mxu0 0.0
      %576 = vmatprep.subr.mxu0 0.0
      %577 = vmatpush1.msra.mxu0 0.0
      %578 = vmatprep.subr.mxu0 0.0
      %579 = vmatpush1.msra.mxu0 0.0
      %580 = vmatprep.mubr.f32.mxu0 0.0
      %581 = vmatmul.mubr.f32.gmra.mrb[0].mxu0 %v443
      %v582 = vpop.f32.mrb[0].mxu0
      %v583 = vadd.f32 %v439, %v582
      %v584 = vpop.f32.mrb[0].mxu0
      %585 = vdwg.mxu0
      %s586 = scalar_lea.vmem %s1, 16
      %v587 = vld [vmem:[%s586] sm:$0xff]
      %588 = vrot.lane.b32.xlu0 %v272, 126
      %v589 = vpop.permute.xlu0 %588
      %590 = vrot.lane.b32.xlu0 %v273, 126
      %v591 = vpop.permute.xlu0 %590
      %592 = vrot.lane.b32.xlu0 %v274, 126
      %v593 = vpop.permute.xlu0 %592
      %594 = vrot.lane.b32.xlu0 %v275, 126
      %v595 = vpop.permute.xlu0 %594
      %vm596 = vcmask 1031168
      %v597 = vsel %vm596, %v589, %v591
      %v598 = vsel %vm596, %v591, %v593
      %v599 = vsel %vm596, %v593, %v595
      %v604 = vsel %vm297, %v587, 0
      %606 = vmatprep.subr.mxu0 %v598
      %607 = vmatpush1.msra.mxu0 %v597
      %608 = vmatprep.subr.mxu0 0.0
      %609 = vmatpush1.msra.mxu0 0.0
      %610 = vmatprep.subr.mxu0 0.0
      %611 = vmatpush1.msra.mxu0 0.0
      %612 = vmatprep.subr.mxu0 0.0
      %613 = vmatpush1.msra.mxu0 0.0
      %614 = vmatprep.subr.mxu0 0.0
      %615 = vmatpush1.msra.mxu0 0.0
      %616 = vmatprep.subr.mxu0 0.0
      %617 = vmatpush1.msra.mxu0 0.0
      %618 = vmatprep.subr.mxu0 0.0
      %619 = vmatpush1.msra.mxu0 0.0
      %620 = vmatprep.subr.mxu0 0.0
      %621 = vmatpush1.msra.mxu0 0.0
      %622 = vmatprep.subr.mxu0 0.0
      %623 = vmatpush1.msra.mxu0 0.0
      %624 = vmatprep.subr.mxu0 0.0
      %625 = vmatpush1.msra.mxu0 0.0
      %626 = vmatprep.subr.mxu0 0.0
      %627 = vmatpush1.msra.mxu0 0.0
      %628 = vmatprep.subr.mxu0 0.0
      %629 = vmatpush1.msra.mxu0 0.0
      %630 = vmatprep.subr.mxu0 0.0
      %631 = vmatpush1.msra.mxu0 0.0
      %632 = vmatprep.subr.mxu0 0.0
      %633 = vmatpush1.msra.mxu0 0.0
      %634 = vmatprep.subr.mxu0 0.0
      %635 = vmatpush1.msra.mxu0 0.0
      %636 = vmatprep.subr.mxu0 0.0
      %637 = vmatpush1.msra.mxu0 0.0
      %638 = vmatprep.subr.mxu0 0.0
      %639 = vmatpush1.msra.mxu0 0.0
      %640 = vmatprep.subr.mxu0 0.0
      %641 = vmatpush1.msra.mxu0 0.0
      %642 = vmatprep.subr.mxu0 0.0
      %643 = vmatpush1.msra.mxu0 0.0
      %644 = vmatprep.subr.mxu0 0.0
      %645 = vmatpush1.msra.mxu0 0.0
      %646 = vmatprep.subr.mxu0 0.0
      %647 = vmatpush1.msra.mxu0 0.0
      %648 = vmatprep.subr.mxu0 0.0
      %649 = vmatpush1.msra.mxu0 0.0
      %650 = vmatprep.subr.mxu0 0.0
      %651 = vmatpush1.msra.mxu0 0.0
      %652 = vmatprep.subr.mxu0 0.0
      %653 = vmatpush1.msra.mxu0 0.0
      %654 = vmatprep.subr.mxu0 0.0
      %655 = vmatpush1.msra.mxu0 0.0
      %656 = vmatprep.subr.mxu0 0.0
      %657 = vmatpush1.msra.mxu0 0.0
      %658 = vmatprep.subr.mxu0 0.0
      %659 = vmatpush1.msra.mxu0 0.0
      %660 = vmatprep.subr.mxu0 0.0
      %661 = vmatpush1.msra.mxu0 0.0
      %662 = vmatprep.subr.mxu0 0.0
      %663 = vmatpush1.msra.mxu0 0.0
      %664 = vmatprep.subr.mxu0 0.0
      %665 = vmatpush1.msra.mxu0 0.0
      %666 = vmatprep.subr.mxu0 0.0
      %667 = vmatpush1.msra.mxu0 0.0
      %668 = vmatprep.subr.mxu0 0.0
      %669 = vmatpush1.msra.mxu0 0.0
      %670 = vmatprep.mubr.f32.mxu0 0.0
      %671 = vmatmul.mubr.f32.gmra.mrb[0].mxu0 %v604
      %v672 = vpop.f32.mrb[0].mxu0
      %v673 = vadd.f32 0.0, %v672
      %v674 = vpop.f32.mrb[0].mxu0
      %v675 = vadd.f32 0.0, %v674
      %676 = vdwg.mxu0
      %677 = vmatprep.subr.mxu0 0.0
      %678 = vmatpush1.msra.mxu0 %v599
      %679 = vmatprep.subr.mxu0 0.0
      %680 = vmatpush1.msra.mxu0 0.0
      %681 = vmatprep.subr.mxu0 0.0
      %682 = vmatpush1.msra.mxu0 0.0
      %683 = vmatprep.subr.mxu0 0.0
      %684 = vmatpush1.msra.mxu0 0.0
      %685 = vmatprep.subr.mxu0 0.0
      %686 = vmatpush1.msra.mxu0 0.0
      %687 = vmatprep.subr.mxu0 0.0
      %688 = vmatpush1.msra.mxu0 0.0
      %689 = vmatprep.subr.mxu0 0.0
      %690 = vmatpush1.msra.mxu0 0.0
      %691 = vmatprep.subr.mxu0 0.0
      %692 = vmatpush1.msra.mxu0 0.0
      %693 = vmatprep.subr.mxu0 0.0
      %694 = vmatpush1.msra.mxu0 0.0
      %695 = vmatprep.subr.mxu0 0.0
      %696 = vmatpush1.msra.mxu0 0.0
      %697 = vmatprep.subr.mxu0 0.0
      %698 = vmatpush1.msra.mxu0 0.0
      %699 = vmatprep.subr.mxu0 0.0
      %700 = vmatpush1.msra.mxu0 0.0
      %701 = vmatprep.subr.mxu0 0.0
      %702 = vmatpush1.msra.mxu0 0.0
      %703 = vmatprep.subr.mxu0 0.0
      %704 = vmatpush1.msra.mxu0 0.0
      %705 = vmatprep.subr.mxu0 0.0
      %706 = vmatpush1.msra.mxu0 0.0
      %707 = vmatprep.subr.mxu0 0.0
      %708 = vmatpush1.msra.mxu0 0.0
      %709 = vmatprep.subr.mxu0 0.0
      %710 = vmatpush1.msra.mxu0 0.0
      %711 = vmatprep.subr.mxu0 0.0
      %712 = vmatpush1.msra.mxu0 0.0
      %713 = vmatprep.subr.mxu0 0.0
      %714 = vmatpush1.msra.mxu0 0.0
      %715 = vmatprep.subr.mxu0 0.0
      %716 = vmatpush1.msra.mxu0 0.0
      %717 = vmatprep.subr.mxu0 0.0
      %718 = vmatpush1.msra.mxu0 0.0
      %719 = vmatprep.subr.mxu0 0.0
      %720 = vmatpush1.msra.mxu0 0.0
      %721 = vmatprep.subr.mxu0 0.0
      %722 = vmatpush1.msra.mxu0 0.0
      %723 = vmatprep.subr.mxu0 0.0
      %724 = vmatpush1.msra.mxu0 0.0
      %725 = vmatprep.subr.mxu0 0.0
      %726 = vmatpush1.msra.mxu0 0.0
      %727 = vmatprep.subr.mxu0 0.0
      %728 = vmatpush1.msra.mxu0 0.0
      %729 = vmatprep.subr.mxu0 0.0
      %730 = vmatpush1.msra.mxu0 0.0
      %731 = vmatprep.subr.mxu0 0.0
      %732 = vmatpush1.msra.mxu0 0.0
      %733 = vmatprep.subr.mxu0 0.0
      %734 = vmatpush1.msra.mxu0 0.0
      %735 = vmatprep.subr.mxu0 0.0
      %736 = vmatpush1.msra.mxu0 0.0
      %737 = vmatprep.subr.mxu0 0.0
      %738 = vmatpush1.msra.mxu0 0.0
      %739 = vmatprep.subr.mxu0 0.0
      %740 = vmatpush1.msra.mxu0 0.0
      %741 = vmatprep.mubr.f32.mxu0 0.0
      %742 = vmatmul.mubr.f32.gmra.mrb[0].mxu0 %v604
      %v743 = vpop.f32.mrb[0].mxu0
      %v744 = vadd.f32 0.0, %v743
      %v745 = vpop.f32.mrb[0].mxu0
      %746 = vdwg.mxu0
      %v747 = vadd.f32 %v512, %v673
      %v748 = vadd.f32 %v514, %v675
      %v749 = vadd.f32 %v583, %v744
      %s750 = scalar_lea.vmem %s1, 24
      %v751 = vld [vmem:[%s750] sm:$0xff]
      %752 = vrot.lane.b32.xlu0 %v272, 110
      %v753 = vpop.permute.xlu0 %752
      %754 = vrot.lane.b32.xlu0 %v273, 110
      %v755 = vpop.permute.xlu0 %754
      %756 = vrot.lane.b32.xlu0 %v274, 110
      %v757 = vpop.permute.xlu0 %756
      %758 = vrot.lane.b32.xlu0 %v275, 110
      %v759 = vpop.permute.xlu0 %758
      %vm760 = vcmask 900096
      %v761 = vsel %vm760, %v753, %v755
      %v762 = vsel %vm760, %v755, %v757
      %v763 = vsel %vm760, %v757, %v759
      %v768 = vsel %vm297, %v751, 0
      %770 = vmatprep.subr.mxu0 %v762
      %771 = vmatpush1.msra.mxu0 %v761
      %772 = vmatprep.subr.mxu0 0.0
      %773 = vmatpush1.msra.mxu0 0.0
      %774 = vmatprep.subr.mxu0 0.0
      %775 = vmatpush1.msra.mxu0 0.0
      %776 = vmatprep.subr.mxu0 0.0
      %777 = vmatpush1.msra.mxu0 0.0
      %778 = vmatprep.subr.mxu0 0.0
      %779 = vmatpush1.msra.mxu0 0.0
      %780 = vmatprep.subr.mxu0 0.0
      %781 = vmatpush1.msra.mxu0 0.0
      %782 = vmatprep.subr.mxu0 0.0
      %783 = vmatpush1.msra.mxu0 0.0
      %784 = vmatprep.subr.mxu0 0.0
      %785 = vmatpush1.msra.mxu0 0.0
      %786 = vmatprep.subr.mxu0 0.0
      %787 = vmatpush1.msra.mxu0 0.0
      %788 = vmatprep.subr.mxu0 0.0
      %789 = vmatpush1.msra.mxu0 0.0
      %790 = vmatprep.subr.mxu0 0.0
      %791 = vmatpush1.msra.mxu0 0.0
      %792 = vmatprep.subr.mxu0 0.0
      %793 = vmatpush1.msra.mxu0 0.0
      %794 = vmatprep.subr.mxu0 0.0
      %795 = vmatpush1.msra.mxu0 0.0
      %796 = vmatprep.subr.mxu0 0.0
      %797 = vmatpush1.msra.mxu0 0.0
      %798 = vmatprep.subr.mxu0 0.0
      %799 = vmatpush1.msra.mxu0 0.0
      %800 = vmatprep.subr.mxu0 0.0
      %801 = vmatpush1.msra.mxu0 0.0
      %802 = vmatprep.subr.mxu0 0.0
      %803 = vmatpush1.msra.mxu0 0.0
      %804 = vmatprep.subr.mxu0 0.0
      %805 = vmatpush1.msra.mxu0 0.0
      %806 = vmatprep.subr.mxu0 0.0
      %807 = vmatpush1.msra.mxu0 0.0
      %808 = vmatprep.subr.mxu0 0.0
      %809 = vmatpush1.msra.mxu0 0.0
      %810 = vmatprep.subr.mxu0 0.0
      %811 = vmatpush1.msra.mxu0 0.0
      %812 = vmatprep.subr.mxu0 0.0
      %813 = vmatpush1.msra.mxu0 0.0
      %814 = vmatprep.subr.mxu0 0.0
      %815 = vmatpush1.msra.mxu0 0.0
      %816 = vmatprep.subr.mxu0 0.0
      %817 = vmatpush1.msra.mxu0 0.0
      %818 = vmatprep.subr.mxu0 0.0
      %819 = vmatpush1.msra.mxu0 0.0
      %820 = vmatprep.subr.mxu0 0.0
      %821 = vmatpush1.msra.mxu0 0.0
      %822 = vmatprep.subr.mxu0 0.0
      %823 = vmatpush1.msra.mxu0 0.0
      %824 = vmatprep.subr.mxu0 0.0
      %825 = vmatpush1.msra.mxu0 0.0
      %826 = vmatprep.subr.mxu0 0.0
      %827 = vmatpush1.msra.mxu0 0.0
      %828 = vmatprep.subr.mxu0 0.0
      %829 = vmatpush1.msra.mxu0 0.0
      %830 = vmatprep.subr.mxu0 0.0
      %831 = vmatpush1.msra.mxu0 0.0
      %832 = vmatprep.subr.mxu0 0.0
      %833 = vmatpush1.msra.mxu0 0.0
      %834 = vmatprep.mubr.f32.mxu0 0.0
      %835 = vmatmul.mubr.f32.gmra.mrb[0].mxu0 %v768
      %v836 = vpop.f32.mrb[0].mxu0
      %v837 = vadd.f32 0.0, %v836
      %v838 = vpop.f32.mrb[0].mxu0
      %v839 = vadd.f32 0.0, %v838
      %840 = vdwg.mxu0
      %841 = vmatprep.subr.mxu0 0.0
      %842 = vmatpush1.msra.mxu0 %v763
      %843 = vmatprep.subr.mxu0 0.0
      %844 = vmatpush1.msra.mxu0 0.0
      %845 = vmatprep.subr.mxu0 0.0
      %846 = vmatpush1.msra.mxu0 0.0
      %847 = vmatprep.subr.mxu0 0.0
      %848 = vmatpush1.msra.mxu0 0.0
      %849 = vmatprep.subr.mxu0 0.0
      %850 = vmatpush1.msra.mxu0 0.0
      %851 = vmatprep.subr.mxu0 0.0
      %852 = vmatpush1.msra.mxu0 0.0
      %853 = vmatprep.subr.mxu0 0.0
      %854 = vmatpush1.msra.mxu0 0.0
      %855 = vmatprep.subr.mxu0 0.0
      %856 = vmatpush1.msra.mxu0 0.0
      %857 = vmatprep.subr.mxu0 0.0
      %858 = vmatpush1.msra.mxu0 0.0
      %859 = vmatprep.subr.mxu0 0.0
      %860 = vmatpush1.msra.mxu0 0.0
      %861 = vmatprep.subr.mxu0 0.0
      %862 = vmatpush1.msra.mxu0 0.0
      %863 = vmatprep.subr.mxu0 0.0
      %864 = vmatpush1.msra.mxu0 0.0
      %865 = vmatprep.subr.mxu0 0.0
      %866 = vmatpush1.msra.mxu0 0.0
      %867 = vmatprep.subr.mxu0 0.0
      %868 = vmatpush1.msra.mxu0 0.0
      %869 = vmatprep.subr.mxu0 0.0
      %870 = vmatpush1.msra.mxu0 0.0
      %871 = vmatprep.subr.mxu0 0.0
      %872 = vmatpush1.msra.mxu0 0.0
      %873 = vmatprep.subr.mxu0 0.0
      %874 = vmatpush1.msra.mxu0 0.0
      %875 = vmatprep.subr.mxu0 0.0
      %876 = vmatpush1.msra.mxu0 0.0
      %877 = vmatprep.subr.mxu0 0.0
      %878 = vmatpush1.msra.mxu0 0.0
      %879 = vmatprep.subr.mxu0 0.0
      %880 = vmatpush1.msra.mxu0 0.0
      %881 = vmatprep.subr.mxu0 0.0
      %882 = vmatpush1.msra.mxu0 0.0
      %883 = vmatprep.subr.mxu0 0.0
      %884 = vmatpush1.msra.mxu0 0.0
      %885 = vmatprep.subr.mxu0 0.0
      %886 = vmatpush1.msra.mxu0 0.0
      %887 = vmatprep.subr.mxu0 0.0
      %888 = vmatpush1.msra.mxu0 0.0
      %889 = vmatprep.subr.mxu0 0.0
      %890 = vmatpush1.msra.mxu0 0.0
      %891 = vmatprep.subr.mxu0 0.0
      %892 = vmatpush1.msra.mxu0 0.0
      %893 = vmatprep.subr.mxu0 0.0
      %894 = vmatpush1.msra.mxu0 0.0
      %895 = vmatprep.subr.mxu0 0.0
      %896 = vmatpush1.msra.mxu0 0.0
      %897 = vmatprep.subr.mxu0 0.0
      %898 = vmatpush1.msra.mxu0 0.0
      %899 = vmatprep.subr.mxu0 0.0
      %900 = vmatpush1.msra.mxu0 0.0
      %901 = vmatprep.subr.mxu0 0.0
      %902 = vmatpush1.msra.mxu0 0.0
      %903 = vmatprep.subr.mxu0 0.0
      %904 = vmatpush1.msra.mxu0 0.0
      %905 = vmatprep.mubr.f32.mxu0 0.0
      %906 = vmatmul.mubr.f32.gmra.mrb[0].mxu0 %v768
      %v907 = vpop.f32.mrb[0].mxu0
      %v908 = vadd.f32 0.0, %v907
      %v909 = vpop.f32.mrb[0].mxu0
      %910 = vdwg.mxu0
      %v911 = vadd.f32 %v747, %v837
      %v912 = vadd.f32 %v748, %v839
      %v913 = vadd.f32 %v749, %v908
      %s914 = scalar_lea.vmem %s1, 32
      %v915 = vld [vmem:[%s914] sm:$0xff]
      %916 = vrot.lane.b32.xlu0 %v272, 109
      %v917 = vpop.permute.xlu0 %916
      %918 = vrot.lane.b32.xlu0 %v273, 109
      %v919 = vpop.permute.xlu0 %918
      %920 = vrot.lane.b32.xlu0 %v274, 109
      %v921 = vpop.permute.xlu0 %920
      %922 = vrot.lane.b32.xlu0 %v275, 109
      %v923 = vpop.permute.xlu0 %922
      %vm924 = vcmask 891904
      %v925 = vsel %vm924, %v917, %v919
      %v926 = vsel %vm924, %v919, %v921
      %v927 = vsel %vm924, %v921, %v923
      %v932 = vsel %vm297, %v915, 0
      %934 = vmatprep.subr.mxu0 %v926
      %935 = vmatpush1.msra.mxu0 %v925
      %936 = vmatprep.subr.mxu0 0.0
      %937 = vmatpush1.msra.mxu0 0.0
      %938 = vmatprep.subr.mxu0 0.0
      %939 = vmatpush1.msra.mxu0 0.0
      %940 = vmatprep.subr.mxu0 0.0
      %941 = vmatpush1.msra.mxu0 0.0
      %942 = vmatprep.subr.mxu0 0.0
      %943 = vmatpush1.msra.mxu0 0.0
      %944 = vmatprep.subr.mxu0 0.0
      %945 = vmatpush1.msra.mxu0 0.0
      %946 = vmatprep.subr.mxu0 0.0
      %947 = vmatpush1.msra.mxu0 0.0
      %948 = vmatprep.subr.mxu0 0.0
      %949 = vmatpush1.msra.mxu0 0.0
      %950 = vmatprep.subr.mxu0 0.0
      %951 = vmatpush1.msra.mxu0 0.0
      %952 = vmatprep.subr.mxu0 0.0
      %953 = vmatpush1.msra.mxu0 0.0
      %954 = vmatprep.subr.mxu0 0.0
      %955 = vmatpush1.msra.mxu0 0.0
      %956 = vmatprep.subr.mxu0 0.0
      %957 = vmatpush1.msra.mxu0 0.0
      %958 = vmatprep.subr.mxu0 0.0
      %959 = vmatpush1.msra.mxu0 0.0
      %960 = vmatprep.subr.mxu0 0.0
      %961 = vmatpush1.msra.mxu0 0.0
      %962 = vmatprep.subr.mxu0 0.0
      %963 = vmatpush1.msra.mxu0 0.0
      %964 = vmatprep.subr.mxu0 0.0
      %965 = vmatpush1.msra.mxu0 0.0
      %966 = vmatprep.subr.mxu0 0.0
      %967 = vmatpush1.msra.mxu0 0.0
      %968 = vmatprep.subr.mxu0 0.0
      %969 = vmatpush1.msra.mxu0 0.0
      %970 = vmatprep.subr.mxu0 0.0
      %971 = vmatpush1.msra.mxu0 0.0
      %972 = vmatprep.subr.mxu0 0.0
      %973 = vmatpush1.msra.mxu0 0.0
      %974 = vmatprep.subr.mxu0 0.0
      %975 = vmatpush1.msra.mxu0 0.0
      %976 = vmatprep.subr.mxu0 0.0
      %977 = vmatpush1.msra.mxu0 0.0
      %978 = vmatprep.subr.mxu0 0.0
      %979 = vmatpush1.msra.mxu0 0.0
      %980 = vmatprep.subr.mxu0 0.0
      %981 = vmatpush1.msra.mxu0 0.0
      %982 = vmatprep.subr.mxu0 0.0
      %983 = vmatpush1.msra.mxu0 0.0
      %984 = vmatprep.subr.mxu0 0.0
      %985 = vmatpush1.msra.mxu0 0.0
      %986 = vmatprep.subr.mxu0 0.0
      %987 = vmatpush1.msra.mxu0 0.0
      %988 = vmatprep.subr.mxu0 0.0
      %989 = vmatpush1.msra.mxu0 0.0
      %990 = vmatprep.subr.mxu0 0.0
      %991 = vmatpush1.msra.mxu0 0.0
      %992 = vmatprep.subr.mxu0 0.0
      %993 = vmatpush1.msra.mxu0 0.0
      %994 = vmatprep.subr.mxu0 0.0
      %995 = vmatpush1.msra.mxu0 0.0
      %996 = vmatprep.subr.mxu0 0.0
      %997 = vmatpush1.msra.mxu0 0.0
      %998 = vmatprep.mubr.f32.mxu0 0.0
      %999 = vmatmul.mubr.f32.gmra.mrb[0].mxu0 %v932
      %v1000 = vpop.f32.mrb[0].mxu0
      %v1001 = vadd.f32 0.0, %v1000
      %v1002 = vpop.f32.mrb[0].mxu0
      %v1003 = vadd.f32 0.0, %v1002
      %1004 = vdwg.mxu0
      %1005 = vmatprep.subr.mxu0 0.0
      %1006 = vmatpush1.msra.mxu0 %v927
      %1007 = vmatprep.subr.mxu0 0.0
      %1008 = vmatpush1.msra.mxu0 0.0
      %1009 = vmatprep.subr.mxu0 0.0
      %1010 = vmatpush1.msra.mxu0 0.0
      %1011 = vmatprep.subr.mxu0 0.0
      %1012 = vmatpush1.msra.mxu0 0.0
      %1013 = vmatprep.subr.mxu0 0.0
      %1014 = vmatpush1.msra.mxu0 0.0
      %1015 = vmatprep.subr.mxu0 0.0
      %1016 = vmatpush1.msra.mxu0 0.0
      %1017 = vmatprep.subr.mxu0 0.0
      %1018 = vmatpush1.msra.mxu0 0.0
      %1019 = vmatprep.subr.mxu0 0.0
      %1020 = vmatpush1.msra.mxu0 0.0
      %1021 = vmatprep.subr.mxu0 0.0
      %1022 = vmatpush1.msra.mxu0 0.0
      %1023 = vmatprep.subr.mxu0 0.0
      %1024 = vmatpush1.msra.mxu0 0.0
      %1025 = vmatprep.subr.mxu0 0.0
      %1026 = vmatpush1.msra.mxu0 0.0
      %1027 = vmatprep.subr.mxu0 0.0
      %1028 = vmatpush1.msra.mxu0 0.0
      %1029 = vmatprep.subr.mxu0 0.0
      %1030 = vmatpush1.msra.mxu0 0.0
      %1031 = vmatprep.subr.mxu0 0.0
      %1032 = vmatpush1.msra.mxu0 0.0
      %1033 = vmatprep.subr.mxu0 0.0
      %1034 = vmatpush1.msra.mxu0 0.0
      %1035 = vmatprep.subr.mxu0 0.0
      %1036 = vmatpush1.msra.mxu0 0.0
      %1037 = vmatprep.subr.mxu0 0.0
      %1038 = vmatpush1.msra.mxu0 0.0
      %1039 = vmatprep.subr.mxu0 0.0
      %1040 = vmatpush1.msra.mxu0 0.0
      %1041 = vmatprep.subr.mxu0 0.0
      %1042 = vmatpush1.msra.mxu0 0.0
      %1043 = vmatprep.subr.mxu0 0.0
      %1044 = vmatpush1.msra.mxu0 0.0
      %1045 = vmatprep.subr.mxu0 0.0
      %1046 = vmatpush1.msra.mxu0 0.0
      %1047 = vmatprep.subr.mxu0 0.0
      %1048 = vmatpush1.msra.mxu0 0.0
      %1049 = vmatprep.subr.mxu0 0.0
      %1050 = vmatpush1.msra.mxu0 0.0
      %1051 = vmatprep.subr.mxu0 0.0
      %1052 = vmatpush1.msra.mxu0 0.0
      %1053 = vmatprep.subr.mxu0 0.0
      %1054 = vmatpush1.msra.mxu0 0.0
      %1055 = vmatprep.subr.mxu0 0.0
      %1056 = vmatpush1.msra.mxu0 0.0
      %1057 = vmatprep.subr.mxu0 0.0
      %1058 = vmatpush1.msra.mxu0 0.0
      %1059 = vmatprep.subr.mxu0 0.0
      %1060 = vmatpush1.msra.mxu0 0.0
      %1061 = vmatprep.subr.mxu0 0.0
      %1062 = vmatpush1.msra.mxu0 0.0
      %1063 = vmatprep.subr.mxu0 0.0
      %1064 = vmatpush1.msra.mxu0 0.0
      %1065 = vmatprep.subr.mxu0 0.0
      %1066 = vmatpush1.msra.mxu0 0.0
      %1067 = vmatprep.subr.mxu0 0.0
      %1068 = vmatpush1.msra.mxu0 0.0
      %1069 = vmatprep.mubr.f32.mxu0 0.0
      %1070 = vmatmul.mubr.f32.gmra.mrb[0].mxu0 %v932
      %v1071 = vpop.f32.mrb[0].mxu0
      %v1072 = vadd.f32 0.0, %v1071
      %v1073 = vpop.f32.mrb[0].mxu0
      %1074 = vdwg.mxu0
      %v1075 = vadd.f32 %v911, %v1001
      %v1076 = vadd.f32 %v912, %v1003
      %v1077 = vadd.f32 %v913, %v1072
      %s1078 = scalar_lea.vmem %s1, 40
      %v1079 = vld [vmem:[%s1078] sm:$0xff]
      %1080 = vrot.lane.b32.xlu0 %v272, 108
      %v1081 = vpop.permute.xlu0 %1080
      %1082 = vrot.lane.b32.xlu0 %v273, 108
      %v1083 = vpop.permute.xlu0 %1082
      %1084 = vrot.lane.b32.xlu0 %v274, 108
      %v1085 = vpop.permute.xlu0 %1084
      %1086 = vrot.lane.b32.xlu0 %v275, 108
      %v1087 = vpop.permute.xlu0 %1086
      %vm1088 = vcmask 883712
      %v1089 = vsel %vm1088, %v1081, %v1083
      %v1090 = vsel %vm1088, %v1083, %v1085
      %v1091 = vsel %vm1088, %v1085, %v1087
      %v1096 = vsel %vm297, %v1079, 0
      %1098 = vmatprep.subr.mxu0 %v1090
      %1099 = vmatpush1.msra.mxu0 %v1089
      %1100 = vmatprep.subr.mxu0 0.0
      %1101 = vmatpush1.msra.mxu0 0.0
      %1102 = vmatprep.subr.mxu0 0.0
      %1103 = vmatpush1.msra.mxu0 0.0
      %1104 = vmatprep.subr.mxu0 0.0
      %1105 = vmatpush1.msra.mxu0 0.0
      %1106 = vmatprep.subr.mxu0 0.0
      %1107 = vmatpush1.msra.mxu0 0.0
      %1108 = vmatprep.subr.mxu0 0.0
      %1109 = vmatpush1.msra.mxu0 0.0
      %1110 = vmatprep.subr.mxu0 0.0
      %1111 = vmatpush1.msra.mxu0 0.0
      %1112 = vmatprep.subr.mxu0 0.0
      %1113 = vmatpush1.msra.mxu0 0.0
      %1114 = vmatprep.subr.mxu0 0.0
      %1115 = vmatpush1.msra.mxu0 0.0
      %1116 = vmatprep.subr.mxu0 0.0
      %1117 = vmatpush1.msra.mxu0 0.0
      %1118 = vmatprep.subr.mxu0 0.0
      %1119 = vmatpush1.msra.mxu0 0.0
      %1120 = vmatprep.subr.mxu0 0.0
      %1121 = vmatpush1.msra.mxu0 0.0
      %1122 = vmatprep.subr.mxu0 0.0
      %1123 = vmatpush1.msra.mxu0 0.0
      %1124 = vmatprep.subr.mxu0 0.0
      %1125 = vmatpush1.msra.mxu0 0.0
      %1126 = vmatprep.subr.mxu0 0.0
      %1127 = vmatpush1.msra.mxu0 0.0
      %1128 = vmatprep.subr.mxu0 0.0
      %1129 = vmatpush1.msra.mxu0 0.0
      %1130 = vmatprep.subr.mxu0 0.0
      %1131 = vmatpush1.msra.mxu0 0.0
      %1132 = vmatprep.subr.mxu0 0.0
      %1133 = vmatpush1.msra.mxu0 0.0
      %1134 = vmatprep.subr.mxu0 0.0
      %1135 = vmatpush1.msra.mxu0 0.0
      %1136 = vmatprep.subr.mxu0 0.0
      %1137 = vmatpush1.msra.mxu0 0.0
      %1138 = vmatprep.subr.mxu0 0.0
      %1139 = vmatpush1.msra.mxu0 0.0
      %1140 = vmatprep.subr.mxu0 0.0
      %1141 = vmatpush1.msra.mxu0 0.0
      %1142 = vmatprep.subr.mxu0 0.0
      %1143 = vmatpush1.msra.mxu0 0.0
      %1144 = vmatprep.subr.mxu0 0.0
      %1145 = vmatpush1.msra.mxu0 0.0
      %1146 = vmatprep.subr.mxu0 0.0
      %1147 = vmatpush1.msra.mxu0 0.0
      %1148 = vmatprep.subr.mxu0 0.0
      %1149 = vmatpush1.msra.mxu0 0.0
      %1150 = vmatprep.subr.mxu0 0.0
      %1151 = vmatpush1.msra.mxu0 0.0
      %1152 = vmatprep.subr.mxu0 0.0
      %1153 = vmatpush1.msra.mxu0 0.0
      %1154 = vmatprep.subr.mxu0 0.0
      %1155 = vmatpush1.msra.mxu0 0.0
      %1156 = vmatprep.subr.mxu0 0.0
      %1157 = vmatpush1.msra.mxu0 0.0
      %1158 = vmatprep.subr.mxu0 0.0
      %1159 = vmatpush1.msra.mxu0 0.0
      %1160 = vmatprep.subr.mxu0 0.0
      %1161 = vmatpush1.msra.mxu0 0.0
      %1162 = vmatprep.mubr.f32.mxu0 0.0
      %1163 = vmatmul.mubr.f32.gmra.mrb[0].mxu0 %v1096
      %v1164 = vpop.f32.mrb[0].mxu0
      %v1165 = vadd.f32 0.0, %v1164
      %v1166 = vpop.f32.mrb[0].mxu0
      %v1167 = vadd.f32 0.0, %v1166
      %1168 = vdwg.mxu0
      %1169 = vmatprep.subr.mxu0 0.0
      %1170 = vmatpush1.msra.mxu0 %v1091
      %1171 = vmatprep.subr.mxu0 0.0
      %1172 = vmatpush1.msra.mxu0 0.0
      %1173 = vmatprep.subr.mxu0 0.0
      %1174 = vmatpush1.msra.mxu0 0.0
      %1175 = vmatprep.subr.mxu0 0.0
      %1176 = vmatpush1.msra.mxu0 0.0
      %1177 = vmatprep.subr.mxu0 0.0
      %1178 = vmatpush1.msra.mxu0 0.0
      %1179 = vmatprep.subr.mxu0 0.0
      %1180 = vmatpush1.msra.mxu0 0.0
      %1181 = vmatprep.subr.mxu0 0.0
      %1182 = vmatpush1.msra.mxu0 0.0
      %1183 = vmatprep.subr.mxu0 0.0
      %1184 = vmatpush1.msra.mxu0 0.0
      %1185 = vmatprep.subr.mxu0 0.0
      %1186 = vmatpush1.msra.mxu0 0.0
      %1187 = vmatprep.subr.mxu0 0.0
      %1188 = vmatpush1.msra.mxu0 0.0
      %1189 = vmatprep.subr.mxu0 0.0
      %1190 = vmatpush1.msra.mxu0 0.0
      %1191 = vmatprep.subr.mxu0 0.0
      %1192 = vmatpush1.msra.mxu0 0.0
      %1193 = vmatprep.subr.mxu0 0.0
      %1194 = vmatpush1.msra.mxu0 0.0
      %1195 = vmatprep.subr.mxu0 0.0
      %1196 = vmatpush1.msra.mxu0 0.0
      %1197 = vmatprep.subr.mxu0 0.0
      %1198 = vmatpush1.msra.mxu0 0.0
      %1199 = vmatprep.subr.mxu0 0.0
      %1200 = vmatpush1.msra.mxu0 0.0
      %1201 = vmatprep.subr.mxu0 0.0
      %1202 = vmatpush1.msra.mxu0 0.0
      %1203 = vmatprep.subr.mxu0 0.0
      %1204 = vmatpush1.msra.mxu0 0.0
      %1205 = vmatprep.subr.mxu0 0.0
      %1206 = vmatpush1.msra.mxu0 0.0
      %1207 = vmatprep.subr.mxu0 0.0
      %1208 = vmatpush1.msra.mxu0 0.0
      %1209 = vmatprep.subr.mxu0 0.0
      %1210 = vmatpush1.msra.mxu0 0.0
      %1211 = vmatprep.subr.mxu0 0.0
      %1212 = vmatpush1.msra.mxu0 0.0
      %1213 = vmatprep.subr.mxu0 0.0
      %1214 = vmatpush1.msra.mxu0 0.0
      %1215 = vmatprep.subr.mxu0 0.0
      %1216 = vmatpush1.msra.mxu0 0.0
      %1217 = vmatprep.subr.mxu0 0.0
      %1218 = vmatpush1.msra.mxu0 0.0
      %1219 = vmatprep.subr.mxu0 0.0
      %1220 = vmatpush1.msra.mxu0 0.0
      %1221 = vmatprep.subr.mxu0 0.0
      %1222 = vmatpush1.msra.mxu0 0.0
      %1223 = vmatprep.subr.mxu0 0.0
      %1224 = vmatpush1.msra.mxu0 0.0
      %1225 = vmatprep.subr.mxu0 0.0
      %1226 = vmatpush1.msra.mxu0 0.0
      %1227 = vmatprep.subr.mxu0 0.0
      %1228 = vmatpush1.msra.mxu0 0.0
      %1229 = vmatprep.subr.mxu0 0.0
      %1230 = vmatpush1.msra.mxu0 0.0
      %1231 = vmatprep.subr.mxu0 0.0
      %1232 = vmatpush1.msra.mxu0 0.0
      %1233 = vmatprep.mubr.f32.mxu0 0.0
      %1234 = vmatmul.mubr.f32.gmra.mrb[0].mxu0 %v1096
      %v1235 = vpop.f32.mrb[0].mxu0
      %v1236 = vadd.f32 0.0, %v1235
      %v1237 = vpop.f32.mrb[0].mxu0
      %1238 = vdwg.mxu0
      %v1239 = vadd.f32 %v1075, %v1165
      %v1240 = vadd.f32 %v1076, %v1167
      %v1241 = vadd.f32 %v1077, %v1236
      %s1242 = scalar_lea.vmem %s1, 48
      %v1243 = vld [vmem:[%s1242] sm:$0xff]
      %1244 = vrot.lane.b32.xlu0 %v272, 92
      %v1245 = vpop.permute.xlu0 %1244
      %1246 = vrot.lane.b32.xlu0 %v273, 92
      %v1247 = vpop.permute.xlu0 %1246
      %1248 = vrot.lane.b32.xlu0 %v274, 92
      %v1249 = vpop.permute.xlu0 %1248
      %1250 = vrot.lane.b32.xlu0 %v275, 92
      %v1251 = vpop.permute.xlu0 %1250
      %vm1252 = vcmask 752640
      %v1253 = vsel %vm1252, %v1245, %v1247
      %v1254 = vsel %vm1252, %v1247, %v1249
      %v1255 = vsel %vm1252, %v1249, %v1251
      %v1260 = vsel %vm297, %v1243, 0
      %1262 = vmatprep.subr.mxu0 %v1254
      %1263 = vmatpush1.msra.mxu0 %v1253
      %1264 = vmatprep.subr.mxu0 0.0
      %1265 = vmatpush1.msra.mxu0 0.0
      %1266 = vmatprep.subr.mxu0 0.0
      %1267 = vmatpush1.msra.mxu0 0.0
      %1268 = vmatprep.subr.mxu0 0.0
      %1269 = vmatpush1.msra.mxu0 0.0
      %1270 = vmatprep.subr.mxu0 0.0
      %1271 = vmatpush1.msra.mxu0 0.0
      %1272 = vmatprep.subr.mxu0 0.0
      %1273 = vmatpush1.msra.mxu0 0.0
      %1274 = vmatprep.subr.mxu0 0.0
      %1275 = vmatpush1.msra.mxu0 0.0
      %1276 = vmatprep.subr.mxu0 0.0
      %1277 = vmatpush1.msra.mxu0 0.0
      %1278 = vmatprep.subr.mxu0 0.0
      %1279 = vmatpush1.msra.mxu0 0.0
      %1280 = vmatprep.subr.mxu0 0.0
      %1281 = vmatpush1.msra.mxu0 0.0
      %1282 = vmatprep.subr.mxu0 0.0
      %1283 = vmatpush1.msra.mxu0 0.0
      %1284 = vmatprep.subr.mxu0 0.0
      %1285 = vmatpush1.msra.mxu0 0.0
      %1286 = vmatprep.subr.mxu0 0.0
      %1287 = vmatpush1.msra.mxu0 0.0
      %1288 = vmatprep.subr.mxu0 0.0
      %1289 = vmatpush1.msra.mxu0 0.0
      %1290 = vmatprep.subr.mxu0 0.0
      %1291 = vmatpush1.msra.mxu0 0.0
      %1292 = vmatprep.subr.mxu0 0.0
      %1293 = vmatpush1.msra.mxu0 0.0
      %1294 = vmatprep.subr.mxu0 0.0
      %1295 = vmatpush1.msra.mxu0 0.0
      %1296 = vmatprep.subr.mxu0 0.0
      %1297 = vmatpush1.msra.mxu0 0.0
      %1298 = vmatprep.subr.mxu0 0.0
      %1299 = vmatpush1.msra.mxu0 0.0
      %1300 = vmatprep.subr.mxu0 0.0
      %1301 = vmatpush1.msra.mxu0 0.0
      %1302 = vmatprep.subr.mxu0 0.0
      %1303 = vmatpush1.msra.mxu0 0.0
      %1304 = vmatprep.subr.mxu0 0.0
      %1305 = vmatpush1.msra.mxu0 0.0
      %1306 = vmatprep.subr.mxu0 0.0
      %1307 = vmatpush1.msra.mxu0 0.0
      %1308 = vmatprep.subr.mxu0 0.0
      %1309 = vmatpush1.msra.mxu0 0.0
      %1310 = vmatprep.subr.mxu0 0.0
      %1311 = vmatpush1.msra.mxu0 0.0
      %1312 = vmatprep.subr.mxu0 0.0
      %1313 = vmatpush1.msra.mxu0 0.0
      %1314 = vmatprep.subr.mxu0 0.0
      %1315 = vmatpush1.msra.mxu0 0.0
      %1316 = vmatprep.subr.mxu0 0.0
      %1317 = vmatpush1.msra.mxu0 0.0
      %1318 = vmatprep.subr.mxu0 0.0
      %1319 = vmatpush1.msra.mxu0 0.0
      %1320 = vmatprep.subr.mxu0 0.0
      %1321 = vmatpush1.msra.mxu0 0.0
      %1322 = vmatprep.subr.mxu0 0.0
      %1323 = vmatpush1.msra.mxu0 0.0
      %1324 = vmatprep.subr.mxu0 0.0
      %1325 = vmatpush1.msra.mxu0 0.0
      %1326 = vmatprep.mubr.f32.mxu0 0.0
      %1327 = vmatmul.mubr.f32.gmra.mrb[0].mxu0 %v1260
      %v1328 = vpop.f32.mrb[0].mxu0
      %v1329 = vadd.f32 0.0, %v1328
      %v1330 = vpop.f32.mrb[0].mxu0
      %v1331 = vadd.f32 0.0, %v1330
      %1332 = vdwg.mxu0
      %1333 = vmatprep.subr.mxu0 0.0
      %1334 = vmatpush1.msra.mxu0 %v1255
      %1335 = vmatprep.subr.mxu0 0.0
      %1336 = vmatpush1.msra.mxu0 0.0
      %1337 = vmatprep.subr.mxu0 0.0
      %1338 = vmatpush1.msra.mxu0 0.0
      %1339 = vmatprep.subr.mxu0 0.0
      %1340 = vmatpush1.msra.mxu0 0.0
      %1341 = vmatprep.subr.mxu0 0.0
      %1342 = vmatpush1.msra.mxu0 0.0
      %1343 = vmatprep.subr.mxu0 0.0
      %1344 = vmatpush1.msra.mxu0 0.0
      %1345 = vmatprep.subr.mxu0 0.0
      %1346 = vmatpush1.msra.mxu0 0.0
      %1347 = vmatprep.subr.mxu0 0.0
      %1348 = vmatpush1.msra.mxu0 0.0
      %1349 = vmatprep.subr.mxu0 0.0
      %1350 = vmatpush1.msra.mxu0 0.0
      %1351 = vmatprep.subr.mxu0 0.0
      %1352 = vmatpush1.msra.mxu0 0.0
      %1353 = vmatprep.subr.mxu0 0.0
      %1354 = vmatpush1.msra.mxu0 0.0
      %1355 = vmatprep.subr.mxu0 0.0
      %1356 = vmatpush1.msra.mxu0 0.0
      %1357 = vmatprep.subr.mxu0 0.0
      %1358 = vmatpush1.msra.mxu0 0.0
      %1359 = vmatprep.subr.mxu0 0.0
      %1360 = vmatpush1.msra.mxu0 0.0
      %1361 = vmatprep.subr.mxu0 0.0
      %1362 = vmatpush1.msra.mxu0 0.0
      %1363 = vmatprep.subr.mxu0 0.0
      %1364 = vmatpush1.msra.mxu0 0.0
      %1365 = vmatprep.subr.mxu0 0.0
      %1366 = vmatpush1.msra.mxu0 0.0
      %1367 = vmatprep.subr.mxu0 0.0
      %1368 = vmatpush1.msra.mxu0 0.0
      %1369 = vmatprep.subr.mxu0 0.0
      %1370 = vmatpush1.msra.mxu0 0.0
      %1371 = vmatprep.subr.mxu0 0.0
      %1372 = vmatpush1.msra.mxu0 0.0
      %1373 = vmatprep.subr.mxu0 0.0
      %1374 = vmatpush1.msra.mxu0 0.0
      %1375 = vmatprep.subr.mxu0 0.0
      %1376 = vmatpush1.msra.mxu0 0.0
      %1377 = vmatprep.subr.mxu0 0.0
      %1378 = vmatpush1.msra.mxu0 0.0
      %1379 = vmatprep.subr.mxu0 0.0
      %1380 = vmatpush1.msra.mxu0 0.0
      %1381 = vmatprep.subr.mxu0 0.0
      %1382 = vmatpush1.msra.mxu0 0.0
      %1383 = vmatprep.subr.mxu0 0.0
      %1384 = vmatpush1.msra.mxu0 0.0
      %1385 = vmatprep.subr.mxu0 0.0
      %1386 = vmatpush1.msra.mxu0 0.0
      %1387 = vmatprep.subr.mxu0 0.0
      %1388 = vmatpush1.msra.mxu0 0.0
      %1389 = vmatprep.subr.mxu0 0.0
      %1390 = vmatpush1.msra.mxu0 0.0
      %1391 = vmatprep.subr.mxu0 0.0
      %1392 = vmatpush1.msra.mxu0 0.0
      %1393 = vmatprep.subr.mxu0 0.0
      %1394 = vmatpush1.msra.mxu0 0.0
      %1395 = vmatprep.subr.mxu0 0.0
      %1396 = vmatpush1.msra.mxu0 0.0
      %1397 = vmatprep.mubr.f32.mxu0 0.0
      %1398 = vmatmul.mubr.f32.gmra.mrb[0].mxu0 %v1260
      %v1399 = vpop.f32.mrb[0].mxu0
      %v1400 = vadd.f32 0.0, %v1399
      %v1401 = vpop.f32.mrb[0].mxu0
      %1402 = vdwg.mxu0
      %v1403 = vadd.f32 %v1239, %v1329
      %v1404 = vadd.f32 %v1240, %v1331
      %v1405 = vadd.f32 %v1241, %v1400
      %s1406 = scalar_lea.vmem %s1, 56
      %v1407 = vld [vmem:[%s1406] sm:$0xff]
      %1408 = vrot.lane.b32.xlu0 %v272, 91
      %v1409 = vpop.permute.xlu0 %1408
      %1410 = vrot.lane.b32.xlu0 %v273, 91
      %v1411 = vpop.permute.xlu0 %1410
      %1412 = vrot.lane.b32.xlu0 %v274, 91
      %v1413 = vpop.permute.xlu0 %1412
      %1414 = vrot.lane.b32.xlu0 %v275, 91
      %v1415 = vpop.permute.xlu0 %1414
      %vm1416 = vcmask 744448
      %v1417 = vsel %vm1416, %v1409, %v1411
      %v1418 = vsel %vm1416, %v1411, %v1413
      %v1419 = vsel %vm1416, %v1413, %v1415
      %v1424 = vsel %vm297, %v1407, 0
      %1426 = vmatprep.subr.mxu0 %v1418
      %1427 = vmatpush1.msra.mxu0 %v1417
      %1428 = vmatprep.subr.mxu0 0.0
      %1429 = vmatpush1.msra.mxu0 0.0
      %1430 = vmatprep.subr.mxu0 0.0
      %1431 = vmatpush1.msra.mxu0 0.0
      %1432 = vmatprep.subr.mxu0 0.0
      %1433 = vmatpush1.msra.mxu0 0.0
      %1434 = vmatprep.subr.mxu0 0.0
      %1435 = vmatpush1.msra.mxu0 0.0
      %1436 = vmatprep.subr.mxu0 0.0
      %1437 = vmatpush1.msra.mxu0 0.0
      %1438 = vmatprep.subr.mxu0 0.0
      %1439 = vmatpush1.msra.mxu0 0.0
      %1440 = vmatprep.subr.mxu0 0.0
      %1441 = vmatpush1.msra.mxu0 0.0
      %1442 = vmatprep.subr.mxu0 0.0
      %1443 = vmatpush1.msra.mxu0 0.0
      %1444 = vmatprep.subr.mxu0 0.0
      %1445 = vmatpush1.msra.mxu0 0.0
      %1446 = vmatprep.subr.mxu0 0.0
      %1447 = vmatpush1.msra.mxu0 0.0
      %1448 = vmatprep.subr.mxu0 0.0
      %1449 = vmatpush1.msra.mxu0 0.0
      %1450 = vmatprep.subr.mxu0 0.0
      %1451 = vmatpush1.msra.mxu0 0.0
      %1452 = vmatprep.subr.mxu0 0.0
      %1453 = vmatpush1.msra.mxu0 0.0
      %1454 = vmatprep.subr.mxu0 0.0
      %1455 = vmatpush1.msra.mxu0 0.0
      %1456 = vmatprep.subr.mxu0 0.0
      %1457 = vmatpush1.msra.mxu0 0.0
      %1458 = vmatprep.subr.mxu0 0.0
      %1459 = vmatpush1.msra.mxu0 0.0
      %1460 = vmatprep.subr.mxu0 0.0
      %1461 = vmatpush1.msra.mxu0 0.0
      %1462 = vmatprep.subr.mxu0 0.0
      %1463 = vmatpush1.msra.mxu0 0.0
      %1464 = vmatprep.subr.mxu0 0.0
      %1465 = vmatpush1.msra.mxu0 0.0
      %1466 = vmatprep.subr.mxu0 0.0
      %1467 = vmatpush1.msra.mxu0 0.0
      %1468 = vmatprep.subr.mxu0 0.0
      %1469 = vmatpush1.msra.mxu0 0.0
      %1470 = vmatprep.subr.mxu0 0.0
      %1471 = vmatpush1.msra.mxu0 0.0
      %1472 = vmatprep.subr.mxu0 0.0
      %1473 = vmatpush1.msra.mxu0 0.0
      %1474 = vmatprep.subr.mxu0 0.0
      %1475 = vmatpush1.msra.mxu0 0.0
      %1476 = vmatprep.subr.mxu0 0.0
      %1477 = vmatpush1.msra.mxu0 0.0
      %1478 = vmatprep.subr.mxu0 0.0
      %1479 = vmatpush1.msra.mxu0 0.0
      %1480 = vmatprep.subr.mxu0 0.0
      %1481 = vmatpush1.msra.mxu0 0.0
      %1482 = vmatprep.subr.mxu0 0.0
      %1483 = vmatpush1.msra.mxu0 0.0
      %1484 = vmatprep.subr.mxu0 0.0
      %1485 = vmatpush1.msra.mxu0 0.0
      %1486 = vmatprep.subr.mxu0 0.0
      %1487 = vmatpush1.msra.mxu0 0.0
      %1488 = vmatprep.subr.mxu0 0.0
      %1489 = vmatpush1.msra.mxu0 0.0
      %1490 = vmatprep.mubr.f32.mxu0 0.0
      %1491 = vmatmul.mubr.f32.gmra.mrb[0].mxu0 %v1424
      %v1492 = vpop.f32.mrb[0].mxu0
      %v1493 = vadd.f32 0.0, %v1492
      %v1494 = vpop.f32.mrb[0].mxu0
      %v1495 = vadd.f32 0.0, %v1494
      %1496 = vdwg.mxu0
      %1497 = vmatprep.subr.mxu0 0.0
      %1498 = vmatpush1.msra.mxu0 %v1419
      %1499 = vmatprep.subr.mxu0 0.0
      %1500 = vmatpush1.msra.mxu0 0.0
      %1501 = vmatprep.subr.mxu0 0.0
      %1502 = vmatpush1.msra.mxu0 0.0
      %1503 = vmatprep.subr.mxu0 0.0
      %1504 = vmatpush1.msra.mxu0 0.0
      %1505 = vmatprep.subr.mxu0 0.0
      %1506 = vmatpush1.msra.mxu0 0.0
      %1507 = vmatprep.subr.mxu0 0.0
      %1508 = vmatpush1.msra.mxu0 0.0
      %1509 = vmatprep.subr.mxu0 0.0
      %1510 = vmatpush1.msra.mxu0 0.0
      %1511 = vmatprep.subr.mxu0 0.0
      %1512 = vmatpush1.msra.mxu0 0.0
      %1513 = vmatprep.subr.mxu0 0.0
      %1514 = vmatpush1.msra.mxu0 0.0
      %1515 = vmatprep.subr.mxu0 0.0
      %1516 = vmatpush1.msra.mxu0 0.0
      %1517 = vmatprep.subr.mxu0 0.0
      %1518 = vmatpush1.msra.mxu0 0.0
      %1519 = vmatprep.subr.mxu0 0.0
      %1520 = vmatpush1.msra.mxu0 0.0
      %1521 = vmatprep.subr.mxu0 0.0
      %1522 = vmatpush1.msra.mxu0 0.0
      %1523 = vmatprep.subr.mxu0 0.0
      %1524 = vmatpush1.msra.mxu0 0.0
      %1525 = vmatprep.subr.mxu0 0.0
      %1526 = vmatpush1.msra.mxu0 0.0
      %1527 = vmatprep.subr.mxu0 0.0
      %1528 = vmatpush1.msra.mxu0 0.0
      %1529 = vmatprep.subr.mxu0 0.0
      %1530 = vmatpush1.msra.mxu0 0.0
      %1531 = vmatprep.subr.mxu0 0.0
      %1532 = vmatpush1.msra.mxu0 0.0
      %1533 = vmatprep.subr.mxu0 0.0
      %1534 = vmatpush1.msra.mxu0 0.0
      %1535 = vmatprep.subr.mxu0 0.0
      %1536 = vmatpush1.msra.mxu0 0.0
      %1537 = vmatprep.subr.mxu0 0.0
      %1538 = vmatpush1.msra.mxu0 0.0
      %1539 = vmatprep.subr.mxu0 0.0
      %1540 = vmatpush1.msra.mxu0 0.0
      %1541 = vmatprep.subr.mxu0 0.0
      %1542 = vmatpush1.msra.mxu0 0.0
      %1543 = vmatprep.subr.mxu0 0.0
      %1544 = vmatpush1.msra.mxu0 0.0
      %1545 = vmatprep.subr.mxu0 0.0
      %1546 = vmatpush1.msra.mxu0 0.0
      %1547 = vmatprep.subr.mxu0 0.0
      %1548 = vmatpush1.msra.mxu0 0.0
      %1549 = vmatprep.subr.mxu0 0.0
      %1550 = vmatpush1.msra.mxu0 0.0
      %1551 = vmatprep.subr.mxu0 0.0
      %1552 = vmatpush1.msra.mxu0 0.0
      %1553 = vmatprep.subr.mxu0 0.0
      %1554 = vmatpush1.msra.mxu0 0.0
      %1555 = vmatprep.subr.mxu0 0.0
      %1556 = vmatpush1.msra.mxu0 0.0
      %1557 = vmatprep.subr.mxu0 0.0
      %1558 = vmatpush1.msra.mxu0 0.0
      %1559 = vmatprep.subr.mxu0 0.0
      %1560 = vmatpush1.msra.mxu0 0.0
      %1561 = vmatprep.mubr.f32.mxu0 0.0
      %1562 = vmatmul.mubr.f32.gmra.mrb[0].mxu0 %v1424
      %v1563 = vpop.f32.mrb[0].mxu0
      %v1564 = vadd.f32 0.0, %v1563
      %v1565 = vpop.f32.mrb[0].mxu0
      %1566 = vdwg.mxu0
      %v1567 = vadd.f32 %v1403, %v1493
      %v1568 = vadd.f32 %v1404, %v1495
      %v1569 = vadd.f32 %v1405, %v1564
      %s1570 = scalar_lea.vmem %s1, 64
      %v1571 = vld [vmem:[%s1570] sm:$0xff]
      %1572 = vrot.lane.b32.xlu0 %v272, 90
      %v1573 = vpop.permute.xlu0 %1572
      %1574 = vrot.lane.b32.xlu0 %v273, 90
      %v1575 = vpop.permute.xlu0 %1574
      %1576 = vrot.lane.b32.xlu0 %v274, 90
      %v1577 = vpop.permute.xlu0 %1576
      %1578 = vrot.lane.b32.xlu0 %v275, 90
      %v1579 = vpop.permute.xlu0 %1578
      %vm1580 = vcmask 736256
      %v1581 = vsel %vm1580, %v1573, %v1575
      %v1582 = vsel %vm1580, %v1575, %v1577
      %v1583 = vsel %vm1580, %v1577, %v1579
      %v1588 = vsel %vm297, %v1571, 0
      %1590 = vmatprep.subr.mxu0 %v1582
      %1591 = vmatpush1.msra.mxu0 %v1581
      %1592 = vmatprep.subr.mxu0 0.0
      %1593 = vmatpush1.msra.mxu0 0.0
      %1594 = vmatprep.subr.mxu0 0.0
      %1595 = vmatpush1.msra.mxu0 0.0
      %1596 = vmatprep.subr.mxu0 0.0
      %1597 = vmatpush1.msra.mxu0 0.0
      %1598 = vmatprep.subr.mxu0 0.0
      %1599 = vmatpush1.msra.mxu0 0.0
      %1600 = vmatprep.subr.mxu0 0.0
      %1601 = vmatpush1.msra.mxu0 0.0
      %1602 = vmatprep.subr.mxu0 0.0
      %1603 = vmatpush1.msra.mxu0 0.0
      %1604 = vmatprep.subr.mxu0 0.0
      %1605 = vmatpush1.msra.mxu0 0.0
      %1606 = vmatprep.subr.mxu0 0.0
      %1607 = vmatpush1.msra.mxu0 0.0
      %1608 = vmatprep.subr.mxu0 0.0
      %1609 = vmatpush1.msra.mxu0 0.0
      %1610 = vmatprep.subr.mxu0 0.0
      %1611 = vmatpush1.msra.mxu0 0.0
      %1612 = vmatprep.subr.mxu0 0.0
      %1613 = vmatpush1.msra.mxu0 0.0
      %1614 = vmatprep.subr.mxu0 0.0
      %1615 = vmatpush1.msra.mxu0 0.0
      %1616 = vmatprep.subr.mxu0 0.0
      %1617 = vmatpush1.msra.mxu0 0.0
      %1618 = vmatprep.subr.mxu0 0.0
      %1619 = vmatpush1.msra.mxu0 0.0
      %1620 = vmatprep.subr.mxu0 0.0
      %1621 = vmatpush1.msra.mxu0 0.0
      %1622 = vmatprep.subr.mxu0 0.0
      %1623 = vmatpush1.msra.mxu0 0.0
      %1624 = vmatprep.subr.mxu0 0.0
      %1625 = vmatpush1.msra.mxu0 0.0
      %1626 = vmatprep.subr.mxu0 0.0
      %1627 = vmatpush1.msra.mxu0 0.0
      %1628 = vmatprep.subr.mxu0 0.0
      %1629 = vmatpush1.msra.mxu0 0.0
      %1630 = vmatprep.subr.mxu0 0.0
      %1631 = vmatpush1.msra.mxu0 0.0
      %1632 = vmatprep.subr.mxu0 0.0
      %1633 = vmatpush1.msra.mxu0 0.0
      %1634 = vmatprep.subr.mxu0 0.0
      %1635 = vmatpush1.msra.mxu0 0.0
      %1636 = vmatprep.subr.mxu0 0.0
      %1637 = vmatpush1.msra.mxu0 0.0
      %1638 = vmatprep.subr.mxu0 0.0
      %1639 = vmatpush1.msra.mxu0 0.0
      %1640 = vmatprep.subr.mxu0 0.0
      %1641 = vmatpush1.msra.mxu0 0.0
      %1642 = vmatprep.subr.mxu0 0.0
      %1643 = vmatpush1.msra.mxu0 0.0
      %1644 = vmatprep.subr.mxu0 0.0
      %1645 = vmatpush1.msra.mxu0 0.0
      %1646 = vmatprep.subr.mxu0 0.0
      %1647 = vmatpush1.msra.mxu0 0.0
      %1648 = vmatprep.subr.mxu0 0.0
      %1649 = vmatpush1.msra.mxu0 0.0
      %1650 = vmatprep.subr.mxu0 0.0
      %1651 = vmatpush1.msra.mxu0 0.0
      %1652 = vmatprep.subr.mxu0 0.0
      %1653 = vmatpush1.msra.mxu0 0.0
      %1654 = vmatprep.mubr.f32.mxu0 0.0
      %1655 = vmatmul.mubr.f32.gmra.mrb[0].mxu0 %v1588
      %v1656 = vpop.f32.mrb[0].mxu0
      %v1657 = vadd.f32 0.0, %v1656
      %v1658 = vpop.f32.mrb[0].mxu0
      %v1659 = vadd.f32 0.0, %v1658
      %1660 = vdwg.mxu0
      %1661 = vmatprep.subr.mxu0 0.0
      %1662 = vmatpush1.msra.mxu0 %v1583
      %1663 = vmatprep.subr.mxu0 0.0
      %1664 = vmatpush1.msra.mxu0 0.0
      %1665 = vmatprep.subr.mxu0 0.0
      %1666 = vmatpush1.msra.mxu0 0.0
      %1667 = vmatprep.subr.mxu0 0.0
      %1668 = vmatpush1.msra.mxu0 0.0
      %1669 = vmatprep.subr.mxu0 0.0
      %1670 = vmatpush1.msra.mxu0 0.0
      %1671 = vmatprep.subr.mxu0 0.0
      %1672 = vmatpush1.msra.mxu0 0.0
      %1673 = vmatprep.subr.mxu0 0.0
      %1674 = vmatpush1.msra.mxu0 0.0
      %1675 = vmatprep.subr.mxu0 0.0
      %1676 = vmatpush1.msra.mxu0 0.0
      %1677 = vmatprep.subr.mxu0 0.0
      %1678 = vmatpush1.msra.mxu0 0.0
      %1679 = vmatprep.subr.mxu0 0.0
      %1680 = vmatpush1.msra.mxu0 0.0
      %1681 = vmatprep.subr.mxu0 0.0
      %1682 = vmatpush1.msra.mxu0 0.0
      %1683 = vmatprep.subr.mxu0 0.0
      %1684 = vmatpush1.msra.mxu0 0.0
      %1685 = vmatprep.subr.mxu0 0.0
      %1686 = vmatpush1.msra.mxu0 0.0
      %1687 = vmatprep.subr.mxu0 0.0
      %1688 = vmatpush1.msra.mxu0 0.0
      %1689 = vmatprep.subr.mxu0 0.0
      %1690 = vmatpush1.msra.mxu0 0.0
      %1691 = vmatprep.subr.mxu0 0.0
      %1692 = vmatpush1.msra.mxu0 0.0
      %1693 = vmatprep.subr.mxu0 0.0
      %1694 = vmatpush1.msra.mxu0 0.0
      %1695 = vmatprep.subr.mxu0 0.0
      %1696 = vmatpush1.msra.mxu0 0.0
      %1697 = vmatprep.subr.mxu0 0.0
      %1698 = vmatpush1.msra.mxu0 0.0
      %1699 = vmatprep.subr.mxu0 0.0
      %1700 = vmatpush1.msra.mxu0 0.0
      %1701 = vmatprep.subr.mxu0 0.0
      %1702 = vmatpush1.msra.mxu0 0.0
      %1703 = vmatprep.subr.mxu0 0.0
      %1704 = vmatpush1.msra.mxu0 0.0
      %1705 = vmatprep.subr.mxu0 0.0
      %1706 = vmatpush1.msra.mxu0 0.0
      %1707 = vmatprep.subr.mxu0 0.0
      %1708 = vmatpush1.msra.mxu0 0.0
      %1709 = vmatprep.subr.mxu0 0.0
      %1710 = vmatpush1.msra.mxu0 0.0
      %1711 = vmatprep.subr.mxu0 0.0
      %1712 = vmatpush1.msra.mxu0 0.0
      %1713 = vmatprep.subr.mxu0 0.0
      %1714 = vmatpush1.msra.mxu0 0.0
      %1715 = vmatprep.subr.mxu0 0.0
      %1716 = vmatpush1.msra.mxu0 0.0
      %1717 = vmatprep.subr.mxu0 0.0
      %1718 = vmatpush1.msra.mxu0 0.0
      %1719 = vmatprep.subr.mxu0 0.0
      %1720 = vmatpush1.msra.mxu0 0.0
      %1721 = vmatprep.subr.mxu0 0.0
      %1722 = vmatpush1.msra.mxu0 0.0
      %1723 = vmatprep.subr.mxu0 0.0
      %1724 = vmatpush1.msra.mxu0 0.0
      %1725 = vmatprep.mubr.f32.mxu0 0.0
      %1726 = vmatmul.mubr.f32.gmra.mrb[0].mxu0 %v1588
      %v1727 = vpop.f32.mrb[0].mxu0
      %v1728 = vadd.f32 0.0, %v1727
      %v1729 = vpop.f32.mrb[0].mxu0
      %1730 = vdwg.mxu0
      %v1731 = vadd.f32 %v1567, %v1657
      %v1732 = vadd.f32 %v1568, %v1659
      %v1733 = vadd.f32 %v1569, %v1728
      %v1734 = vld [vmem:[%s194] sm:$0xff]
      %1736 = vset.pattern.permute.xlu0 0
      %1737 = vperm.xlu0 %1736, %v1734
      %v1738 = vpop.permute.xlu0 %1737
      %v1740 = vmul.f32 %v1731, %v1738
      %v1741 = vmul.f32 %v1732, %v1738
      %v1742 = vmul.f32 %v1733, %v1738
      %v1743 = vld [vmem:[%s198] sm:$0xff]
      %1745 = vset.pattern.permute.xlu0 0
      %1746 = vperm.xlu0 %1745, %v1743
      %v1747 = vpop.permute.xlu0 %1746
      %v1749 = vadd.f32 %v1740, %v1747
      %v1750 = vadd.f32 %v1741, %v1747
      %v1751 = vadd.f32 %v1742, %v1747
      %1752 = vst [vmem:[%s207] sm:$0xff] %v1749
      %1753 = vst [vmem:[%s207 + $0x8] sm:$0xff] %v1750
      %1754 = vst [vmem:[%s207 + $0x10] sm:$0xff] %v1751
      %s1755 = smul.u32 3, %s20
      %p1756 = scmp.lt.s32.totalorder %s19, 1
      %s1757 = scalar_select %p1756, %s19, 1
      %p1758 = scmp.lt.s32.totalorder %s1755, 2
      %s1759 = scalar_select %p1758, %s1755, 2
      %s1760 = smul.addr %s1757, 3
      %s1761 = sadd.s32 %s1759, %s1760
      %s1762 = smul.addr %s1761, 8
      %s1763 = scalar_lea.vmem %s4, %s1762
      // Predicated region
      $region67: #{moe_layer_forward.1} parent=31 // pred_check
        %p1764 = pneg %p120
      $region68: #{moe_layer_forward.1} parent=31 // pred_check_branch
        %1766 = sbr.rel (%p1764) target = $region70
      $region69: #{moe_layer_forward.1} parent=31 // pred_region
        %s1767 = smul.u32 3, %s20
      $region70: #{moe_layer_forward.1} parent=31 // pred_fallthru
        _
    $region32: #{moe_layer_forward.1} parent=5 // pred_fallthru
      _
    %p1768 = scmp.le.s32.totalorder 2, %s10
    // Predicated region
    $region71: #{moe_layer_forward.1} parent=5 // pred_check
      %p1769 = pneg %p1768
    $region72: #{moe_layer_forward.1} parent=5 // pred_check_branch
      %1771 = sbr.rel (%p1769) target = $region74
    $region73: #{moe_layer_forward.1} parent=5 // pred_region
      %s1772 = ssub.s32 %s10, 2
      // Predicated region
      $region75: #{moe_layer_forward.1} parent=73 // pred_check
        %p1773 = pneg %p126
      $region76: #{moe_layer_forward.1} parent=73 // pred_check_branch
        %1775 = sbr.rel (%p1773) target = $region78
      $region77: #{moe_layer_forward.1} parent=73 // pred_region
        %s1776 = smul.u32 3, %s22
        %p1777 = scmp.lt.s32.totalorder %s21, 1
        %s1778 = scalar_select %p1777, %s21, 1
        %p1779 = scmp.lt.s32.totalorder %s1776, 2
        %s1780 = scalar_select %p1779, %s1776, 2
        %s1781 = smul.addr %s1778, 3
        %s1782 = sadd.s32 %s1780, %s1781
        %s1783 = smul.addr %s1782, 8
        %s1784 = scalar_lea.vmem %s4, %s1783
      $region78: #{moe_layer_forward.1} parent=73 // pred_fallthru
        _
    $region74: #{moe_layer_forward.1} parent=5 // pred_fallthru
      _
  $region6: #{moe_layer_forward.1} parent=0 // loop_footer
    %s14 = sadd.s32 1, %s10
  $region7: #{moe_layer_forward.1} parent=0 // loop_footer_branch
    %9 = sbr.rel target = $region3
  $region8: #{moe_layer_forward.1} parent=0 // loop_exit
    _
  %1785 = vsyncmov [#allocation3]
  %s1786 = vpop.sfrf %1785
  %p1787 = scmp.eq.s32.totalorder %s1786, 0
  %p1788 = pneg %p1787
  %1790 = shalt.err (%p1788)

</llo_original>
